<compile_context>
chip_gen: v7x
topology: tpu7x:2x2x1
jax: 0.10.0
libtpu: 0.0.40
codegen_flags: <defaults>
</compile_context>

<pallas_src>
import jax
import jax.numpy as jnp
from jax.experimental import pallas as pl
from jax.experimental.pallas import tpu as pltpu

NUM_CLASSES = 3
HIDDEN1 = 512
HIDDEN2 = 256
OUT_PAD = 128          # lane-dense padded logit width
DEFAULT_BATCH_TILE = 128


def _mlp_kernel(txt_ref, img_ref, w1t_ref, w1i_ref, b1_ref,
                w2_ref, b2_ref, w3_ref, b3_ref, o_ref):
    # fc1, split over the two modalities (concat fused into two MXU matmuls
    # accumulating into the same f32 tile) + bias + ReLU.
    h1 = jnp.dot(txt_ref[...], w1t_ref[...], preferred_element_type=jnp.float32)
    h1 = h1 + jnp.dot(img_ref[...], w1i_ref[...], preferred_element_type=jnp.float32)
    h1 = jnp.maximum(h1 + b1_ref[...], 0.0).astype(jnp.bfloat16)
    # fc2 + ReLU
    h2 = jnp.dot(h1, w2_ref[...], preferred_element_type=jnp.float32)
    h2 = jnp.maximum(h2 + b2_ref[...], 0.0).astype(jnp.bfloat16)
    # fc3 (logits, lane-dense 128-wide padded output; pad columns are zero)
    out = jnp.dot(h2, w3_ref[...], preferred_element_type=jnp.float32)
    o_ref[...] = (out + b3_ref[...]).astype(o_ref.dtype)


def multimodal_forward(text_features, image_features, params,
                       *, batch_tile=DEFAULT_BATCH_TILE):
    """text_features: (B, T) f32; image_features: (B, C, H, W) f32."""
    B = text_features.shape[0]
    img_flat = image_features.reshape(B, -1)
    t_dim = text_features.shape[1]
    i_dim = img_flat.shape[1]

    # --- pack params for the kernel (bf16 weights, split W1, padded fc3) ---
    w1 = params["w1"]
    w1t = w1[:t_dim].astype(jnp.bfloat16)                       # (T, 512)
    w1i = w1[t_dim:].astype(jnp.bfloat16)                       # (I, 512)
    w2 = params["w2"].astype(jnp.bfloat16)                      # (512, 256)
    w3 = jnp.pad(params["w3"],
                 ((0, 0), (0, OUT_PAD - NUM_CLASSES))).astype(jnp.bfloat16)
    b1 = params["b1"]                                           # (1, 512) f32
    b2 = params["b2"]                                           # (1, 256) f32
    b3 = jnp.pad(params["b3"], ((0, 0), (0, OUT_PAD - NUM_CLASSES)))  # (1,128)

    txt = text_features.astype(jnp.bfloat16)
    img = img_flat.astype(jnp.bfloat16)

    # --- batch tiling (pad B up to a multiple of the batch tile) ---
    tb = min(batch_tile, ((B + 7) // 8) * 8)
    Bp = pl.cdiv(B, tb) * tb
    if Bp != B:
        txt = jnp.pad(txt, ((0, Bp - B), (0, 0)))
        img = jnp.pad(img, ((0, Bp - B), (0, 0)))
    grid = (Bp // tb,)

    resident = lambda i: (0, 0)   # weights/biases: same block every step (VMEM-resident)

    out = pl.pallas_call(
        _mlp_kernel,
        out_shape=jax.ShapeDtypeStruct((Bp, OUT_PAD), jnp.float32),
        grid=grid,
        in_specs=[
            pl.BlockSpec((tb, t_dim), lambda i: (i, 0)),
            pl.BlockSpec((tb, i_dim), lambda i: (i, 0)),
            pl.BlockSpec(w1t.shape, resident),
            pl.BlockSpec(w1i.shape, resident),
            pl.BlockSpec(b1.shape, resident),
            pl.BlockSpec(w2.shape, resident),
            pl.BlockSpec(b2.shape, resident),
            pl.BlockSpec(w3.shape, resident),
            pl.BlockSpec(b3.shape, resident),
        ],
        out_specs=pl.BlockSpec((tb, OUT_PAD), lambda i: (i, 0)),
        compiler_params=pltpu.CompilerParams(
            dimension_semantics=("parallel",)),
    )(txt, img, w1t, w1i, b1, w2, b2, w3, b3)

    return out[:B, :NUM_CLASSES]


def init_params(key, input_size):
    """Deterministic init mimicking nn.Linear's U(-1/sqrt(fan_in), 1/sqrt(fan_in))."""
    def linear(k, fan_in, fan_out):
        kw, kb = jax.random.split(k)
        bound = 1.0 / jnp.sqrt(jnp.float32(fan_in))
        w = jax.random.uniform(kw, (fan_in, fan_out), jnp.float32, -bound, bound)
        b = jax.random.uniform(kb, (1, fan_out), jnp.float32, -bound, bound)
        return w, b

    k1, k2, k3 = jax.random.split(key, 3)
    w1, b1 = linear(k1, input_size, HIDDEN1)
    w2, b2 = linear(k2, HIDDEN1, HIDDEN2)
    w3, b3 = linear(k3, HIDDEN2, NUM_CLASSES)
    return {"w1": w1, "b1": b1, "w2": w2, "b2": b2, "w3": w3, "b3": b3}


def reference_forward_mixed(text, image, params):
    """Pure-JAX reference with the same bf16-in / f32-accumulate numerics."""
    bf = jnp.bfloat16
    x = jnp.concatenate([text, image.reshape(text.shape[0], -1)], axis=1).astype(bf)
    h1 = jnp.dot(x, params["w1"].astype(bf), preferred_element_type=jnp.float32)
    h1 = jnp.maximum(h1 + params["b1"], 0.0).astype(bf)
    h2 = jnp.dot(h1, params["w2"].astype(bf), preferred_element_type=jnp.float32)
    h2 = jnp.maximum(h2 + params["b2"], 0.0).astype(bf)
    return jnp.dot(h2, params["w3"].astype(bf),
                   preferred_element_type=jnp.float32) + params["b3"]


def reference_forward_f32(text, image, params):
    x = jnp.concatenate([text, image.reshape(text.shape[0], -1)], axis=1)
    h1 = jnp.maximum(x @ params["w1"] + params["b1"], 0.0)
    h2 = jnp.maximum(h1 @ params["w2"] + params["b2"], 0.0)
    return h2 @ params["w3"] + params["b3"]


if __name__ == "__main__":
    key = jax.random.PRNGKey(0)
    k_img, k_txt, k_par = jax.random.split(key, 3)

    # Small synthetic multimodal inputs (mirrors the script's data prep):
    # image_features: NCHW conv-style features flattened per-sample;
    # text_features:  TF-IDF-style dense vectors.  Batch is large enough to
    # exercise the batch-tiled grid (grid=(2,), weights resident across tiles).
    B, C, H, W = 256, 4, 8, 8
    TEXT_DIM = 64
    image_features = jax.random.normal(k_img, (B, C, H, W), jnp.float32)
    text_features = jax.random.uniform(k_txt, (B, TEXT_DIM), jnp.float32)
    input_size = TEXT_DIM + C * H * W

    params = init_params(k_par, input_size)

    out = multimodal_forward(text_features, image_features, params,
                             batch_tile=DEFAULT_BATCH_TILE)
    out = jax.block_until_ready(out)
    assert out.shape == (B, NUM_CLASSES)

    ref_mixed = reference_forward_mixed(text_features, image_features, params)
    ref_f32 = reference_forward_f32(text_features, image_features, params)
    assert jnp.allclose(out, ref_mixed, atol=1e-2, rtol=1e-2)
    assert jnp.allclose(out, ref_f32, atol=5e-2, rtol=5e-2)

    print("KERNEL_OK")
</pallas_src>

<mosaic_0001>
module attributes {stable_mosaic.version = 11 : i64} {
  func.func @_mlp_kernel(%arg0: i32, %arg1: memref<128x64xbf16, #tpu.memory_space<vmem>>, %arg2: memref<128x256xbf16, #tpu.memory_space<vmem>>, %arg3: memref<64x512xbf16, #tpu.memory_space<vmem>>, %arg4: memref<256x512xbf16, #tpu.memory_space<vmem>>, %arg5: memref<1x512xf32, #tpu.memory_space<vmem>>, %arg6: memref<512x256xbf16, #tpu.memory_space<vmem>>, %arg7: memref<1x256xf32, #tpu.memory_space<vmem>>, %arg8: memref<256x128xbf16, #tpu.memory_space<vmem>>, %arg9: memref<1x128xf32, #tpu.memory_space<vmem>>, %arg10: memref<128x128xf32, #tpu.memory_space<vmem>>) attributes {dimension_semantics = [#tpu.dimension_semantics<parallel>], iteration_bounds = array<i64: 2>, scalar_prefetch = 0 : i64, scratch_operands = 0 : i64, tpu.core_type = #tpu.core_type<tc>, window_params = [{transform_indices = @transform_0, window_bounds = array<i64: 128, 64>}, {transform_indices = @transform_1, window_bounds = array<i64: 128, 256>}, {pipeline_mode = #tpu.pipeline_mode<synchronous>, transform_indices = @transform_2, window_bounds = array<i64: 64, 512>}, {pipeline_mode = #tpu.pipeline_mode<synchronous>, transform_indices = @transform_3, window_bounds = array<i64: 256, 512>}, {pipeline_mode = #tpu.pipeline_mode<synchronous>, transform_indices = @transform_4, window_bounds = array<i64: 1, 512>}, {pipeline_mode = #tpu.pipeline_mode<synchronous>, transform_indices = @transform_5, window_bounds = array<i64: 512, 256>}, {pipeline_mode = #tpu.pipeline_mode<synchronous>, transform_indices = @transform_6, window_bounds = array<i64: 1, 256>}, {pipeline_mode = #tpu.pipeline_mode<synchronous>, transform_indices = @transform_7, window_bounds = array<i64: 256, 128>}, {pipeline_mode = #tpu.pipeline_mode<synchronous>, transform_indices = @transform_8, window_bounds = array<i64: 1, 128>}, {transform_indices = @transform_9, window_bounds = array<i64: 128, 128>}]} {
    %c0 = arith.constant 0 : index
    %c0_0 = arith.constant 0 : index
    %0 = vector.load %arg1[%c0, %c0_0] : memref<128x64xbf16, #tpu.memory_space<vmem>>, vector<128x64xbf16>
    %c0_1 = arith.constant 0 : index
    %c0_2 = arith.constant 0 : index
    %1 = vector.load %arg3[%c0_1, %c0_2] : memref<64x512xbf16, #tpu.memory_space<vmem>>, vector<64x512xbf16>
    %cst = arith.constant dense<0.000000e+00> : vector<128x512xf32>
    %2 = tpu.matmul %0, %1, %cst {dimension_numbers = #tpu.dot_dimension_numbers<[1], [0], [0], [1], [0, 0, 1, 1], [], []>} : vector<128x64xbf16>, vector<64x512xbf16>, vector<128x512xf32> -> vector<128x512xf32>
    %c0_3 = arith.constant 0 : index
    %c0_4 = arith.constant 0 : index
    %3 = vector.load %arg2[%c0_3, %c0_4] : memref<128x256xbf16, #tpu.memory_space<vmem>>, vector<128x256xbf16>
    %c0_5 = arith.constant 0 : index
    %c0_6 = arith.constant 0 : index
    %4 = vector.load %arg4[%c0_5, %c0_6] : memref<256x512xbf16, #tpu.memory_space<vmem>>, vector<256x512xbf16>
    %cst_7 = arith.constant dense<0.000000e+00> : vector<128x512xf32>
    %5 = tpu.matmul %3, %4, %cst_7 {dimension_numbers = #tpu.dot_dimension_numbers<[1], [0], [0], [1], [0, 0, 1, 1], [], []>} : vector<128x256xbf16>, vector<256x512xbf16>, vector<128x512xf32> -> vector<128x512xf32>
    %6 = arith.addf %2, %5 : vector<128x512xf32>
    %c0_8 = arith.constant 0 : index
    %c0_9 = arith.constant 0 : index
    %7 = vector.load %arg5[%c0_8, %c0_9] : memref<1x512xf32, #tpu.memory_space<vmem>>, vector<1x512xf32>
    %8 = vector.broadcast %7 : vector<1x512xf32> to vector<128x512xf32>
    %9 = arith.addf %6, %8 : vector<128x512xf32>
    %cst_10 = arith.constant 0.000000e+00 : f32
    %10 = vector.broadcast %cst_10 : f32 to vector<128x512xf32>
    %11 = arith.maximumf %9, %10 : vector<128x512xf32>
    %12 = arith.truncf %11 : vector<128x512xf32> to vector<128x512xbf16>
    %c0_11 = arith.constant 0 : index
    %c0_12 = arith.constant 0 : index
    %13 = vector.load %arg6[%c0_11, %c0_12] : memref<512x256xbf16, #tpu.memory_space<vmem>>, vector<512x256xbf16>
    %cst_13 = arith.constant dense<0.000000e+00> : vector<128x256xf32>
    %14 = tpu.matmul %12, %13, %cst_13 {dimension_numbers = #tpu.dot_dimension_numbers<[1], [0], [0], [1], [0, 0, 1, 1], [], []>} : vector<128x512xbf16>, vector<512x256xbf16>, vector<128x256xf32> -> vector<128x256xf32>
    %c0_14 = arith.constant 0 : index
    %c0_15 = arith.constant 0 : index
    %15 = vector.load %arg7[%c0_14, %c0_15] : memref<1x256xf32, #tpu.memory_space<vmem>>, vector<1x256xf32>
    %16 = vector.broadcast %15 : vector<1x256xf32> to vector<128x256xf32>
    %17 = arith.addf %14, %16 : vector<128x256xf32>
    %cst_16 = arith.constant 0.000000e+00 : f32
    %18 = vector.broadcast %cst_16 : f32 to vector<128x256xf32>
    %19 = arith.maximumf %17, %18 : vector<128x256xf32>
    %20 = arith.truncf %19 : vector<128x256xf32> to vector<128x256xbf16>
    %c0_17 = arith.constant 0 : index
    %c0_18 = arith.constant 0 : index
    %21 = vector.load %arg8[%c0_17, %c0_18] : memref<256x128xbf16, #tpu.memory_space<vmem>>, vector<256x128xbf16>
    %cst_19 = arith.constant dense<0.000000e+00> : vector<128x128xf32>
    %22 = tpu.matmul %20, %21, %cst_19 {dimension_numbers = #tpu.dot_dimension_numbers<[1], [0], [0], [1], [0, 0, 1, 1], [], []>} : vector<128x256xbf16>, vector<256x128xbf16>, vector<128x128xf32> -> vector<128x128xf32>
    %c0_20 = arith.constant 0 : index
    %c0_21 = arith.constant 0 : index
    %23 = vector.load %arg9[%c0_20, %c0_21] : memref<1x128xf32, #tpu.memory_space<vmem>>, vector<1x128xf32>
    %24 = vector.broadcast %23 : vector<1x128xf32> to vector<128x128xf32>
    %25 = arith.addf %22, %24 : vector<128x128xf32>
    %c0_22 = arith.constant 0 : index
    %c0_23 = arith.constant 0 : index
    %26 = vector.load %arg10[%c0_22, %c0_23] : memref<128x128xf32, #tpu.memory_space<vmem>>, vector<128x128xf32>
    tpu.vector_store %arg10[%c0_22, %c0_23], %25 {strides = array<i32>} : memref<128x128xf32, #tpu.memory_space<vmem>>, vector<128x128xf32>,
    return
  }
  func.func @transform_0(%arg0: i32) -> (i32, i32) {
    %c0_i32 = arith.constant 0 : i32
    %c0_i32_0 = arith.constant 0 : i32
    return %arg0, %c0_i32 : i32, i32
  }
  func.func @transform_1(%arg0: i32) -> (i32, i32) {
    %c0_i32 = arith.constant 0 : i32
    %c0_i32_0 = arith.constant 0 : i32
    return %arg0, %c0_i32 : i32, i32
  }
  func.func @transform_2(%arg0: i32) -> (i32, i32) {
    %c0_i32 = arith.constant 0 : i32
    %c0_i32_0 = arith.constant 0 : i32
    %c0_i32_1 = arith.constant 0 : i32
    return %c0_i32, %c0_i32_0 : i32, i32
  }
  func.func @transform_3(%arg0: i32) -> (i32, i32) {
    %c0_i32 = arith.constant 0 : i32
    %c0_i32_0 = arith.constant 0 : i32
    %c0_i32_1 = arith.constant 0 : i32
    return %c0_i32, %c0_i32_0 : i32, i32
  }
  func.func @transform_4(%arg0: i32) -> (i32, i32) {
    %c0_i32 = arith.constant 0 : i32
    %c0_i32_0 = arith.constant 0 : i32
    %c0_i32_1 = arith.constant 0 : i32
    return %c0_i32, %c0_i32_0 : i32, i32
  }
  func.func @transform_5(%arg0: i32) -> (i32, i32) {
    %c0_i32 = arith.constant 0 : i32
    %c0_i32_0 = arith.constant 0 : i32
    %c0_i32_1 = arith.constant 0 : i32
    return %c0_i32, %c0_i32_0 : i32, i32
  }
  func.func @transform_6(%arg0: i32) -> (i32, i32) {
    %c0_i32 = arith.constant 0 : i32
    %c0_i32_0 = arith.constant 0 : i32
    %c0_i32_1 = arith.constant 0 : i32
    return %c0_i32, %c0_i32_0 : i32, i32
  }
  func.func @transform_7(%arg0: i32) -> (i32, i32) {
    %c0_i32 = arith.constant 0 : i32
    %c0_i32_0 = arith.constant 0 : i32
    %c0_i32_1 = arith.constant 0 : i32
    return %c0_i32, %c0_i32_0 : i32, i32
  }
  func.func @transform_8(%arg0: i32) -> (i32, i32) {
    %c0_i32 = arith.constant 0 : i32
    %c0_i32_0 = arith.constant 0 : i32
    %c0_i32_1 = arith.constant 0 : i32
    return %c0_i32, %c0_i32_0 : i32, i32
  }
  func.func @transform_9(%arg0: i32) -> (i32, i32) {
    %c0_i32 = arith.constant 0 : i32
    %c0_i32_0 = arith.constant 0 : i32
    return %arg0, %c0_i32 : i32, i32
  }
}

</mosaic_0001>

<llo_original>
// kernel: tpu_custom_call.1
$region0: #{tpu_custom_call.1}
  #allocation0 [shape = 'u32[]', space=smem, size = 0x4, offset = 0x4, fixed_abs, tag = 'smem constant byte address 0x4 - core index']
  #allocation1 [shape = 'u32[144,128]{1,0:T(1,128)}', space=vmem, size = 0x12000, scoped, tag = 'internal scratch']
  %s0 = inlined_call_operand.vmem [shape: bf16[256,64], index: 0, kind: input, shape index: {}]
  %s1 = inlined_call_operand.hbm [shape: bf16[256,256], index: 1, kind: input, shape index: {}]
  %s2 = inlined_call_operand.vmem [shape: bf16[64,512], index: 2, kind: input, shape index: {}]
  %s3 = inlined_call_operand.hbm [shape: bf16[256,512], index: 3, kind: input, shape index: {}]
  %s4 = inlined_call_operand.vmem [shape: f32[1,512], index: 4, kind: input, shape index: {}]
  %s5 = inlined_call_operand.hbm [shape: bf16[512,256], index: 5, kind: input, shape index: {}]
  %s6 = inlined_call_operand.vmem [shape: f32[1,256], index: 6, kind: input, shape index: {}]
  %s7 = inlined_call_operand.hbm [shape: bf16[256,128], index: 7, kind: input, shape index: {}]
  %s8 = inlined_call_operand.vmem [shape: f32[1,128], index: 8, kind: input, shape index: {}]
  %s9 = inlined_call_operand.hbm [shape: f32[256,128], index: 9, kind: output, shape index: {}]
  %s10 = sld [smem:[#allocation0]]
  $region85: #{tpu_custom_call.1} parent=0
    _
  %s12 = ssub.s32 1, %s10
  %s13 = scalar_select 0, %s12, %s10
  $region1: #{tpu_custom_call.1} parent=0
    #allocation2 [shape = 'u8[131072]{0}', space=vmem, size = 0x20000, scoped, tag = 'input window, operand 1']
    #allocation3 [shape = 's32[2]{0}', space=sflag, size = 0x8, scoped, tag = 'scoped memory for tpu_custom_call.1']
    #allocation4 [shape = 's32[2]{0}', space=sflag, size = 0x8, scoped, tag = 'scoped memory for tpu_custom_call.1']
    #allocation5 [shape = 'u8[262144]{0}', space=vmem, size = 0x40000, scoped, tag = 'input window, operand 3, single buffered']
    #allocation6 [shape = 's32[1]{0}', space=sflag, size = 0x4, scoped, tag = 'scoped memory for tpu_custom_call.1']
    #allocation7 [shape = 'u8[262144]{0}', space=vmem, size = 0x40000, scoped, tag = 'input window, operand 5, single buffered']
    #allocation8 [shape = 'u8[65536]{0}', space=vmem, size = 0x10000, scoped, tag = 'input window, operand 7, single buffered']
    #allocation9 [shape = 's32[1]{0}', space=sflag, size = 0x4, scoped, tag = 'scoped memory for tpu_custom_call.1']
    #allocation10 [shape = 'u8[131072]{0}', space=vmem, size = 0x20000, scoped, tag = 'output window, operand 0']
    %14 = vsyncpa [#allocation3], 0
    %s15 = scalar_lea.sflag [#allocation3], 1
    %16 = vsyncpa %s15, 0
    %17 = vsyncpa [#allocation6], 0
    %18 = vsyncpa [#allocation9], 0
    %19 = vsyncpa [#allocation4], 0
    %s20 = scalar_lea.sflag [#allocation4], 1
    %21 = vsyncpa %s20, 0
    loop: start=0, step=1, limit=4
    $region2: #{tpu_custom_call.1} parent=1 // loop_pre_header
      _
    $region3: #{tpu_custom_call.1} parent=1 // loop_header
      %s23 = sphi 0, %s27
      %p24 = scmp.ge.s32.totalorder %s23, 4
      %s33 = sphi 0, %s35
      %s36 = sphi 0, %s33
      %s37 = sphi 0, %s36
      %s53 = sphi 0, %s37
      %s59 = sphi 0, %s61
      %s62 = sphi 0, %s59
      %s63 = sphi 0, %s62
      %s79 = sphi 0, %s63
      %s83 = sphi 0, %s83
      %s85 = sphi 0, %s83
      %s86 = sphi 0, %s85
      %s100 = sphi 0, %s86
      %s104 = sphi 0, %s104
      %s106 = sphi 0, %s104
      %s107 = sphi 0, %s106
      %s121 = sphi 0, %s107
      %s125 = sphi 0, %s125
      %s127 = sphi 0, %s125
      %s128 = sphi 0, %s127
      %s142 = sphi 0, %s128
      %s146 = sphi 0, %s146
      %s148 = sphi 0, %s146
      %s149 = sphi 0, %s148
      %s163 = sphi 0, %s149
      %s167 = sphi 0, %s167
      %s169 = sphi 0, %s167
      %s170 = sphi 0, %s169
      %s184 = sphi 0, %s170
      %s188 = sphi 0, %s188
      %s190 = sphi 0, %s188
      %s191 = sphi 0, %s190
      %s205 = sphi 0, %s191
      %s209 = sphi 0, %s209
      %s211 = sphi 0, %s209
      %s212 = sphi 0, %s211
      %s226 = sphi 0, %s212
      %s232 = sphi 0, %s234
      %s235 = sphi 0, %s232
      %s236 = sphi 0, %s235
      %s252 = sphi 0, %s236
    $region4: #{tpu_custom_call.1} parent=1 // loop_header_branch
      %26 = sbr.rel (%p24) target = $region8
    $region5: #{tpu_custom_call.1} parent=1 // loop_body
      %s28 = ssub.s32 %s23, 1
      %s29 = ssub.s32 %s23, 2
      %s30 = sadd.s32 %s23, 1
      %s31 = ssub.s32 %s23, %s30
      %p32 = scmp.eq.s32.totalorder %s31, 0
      %s34 = sadd.s32 %s33, 1
      %s35 = scalar_select %p32, %s33, %s34
      %p38 = pneg %p32
      %p39 = scmp.eq.s32.totalorder %s23, 1
      %p40 = por %p38, %p39
      %p41 = scmp.ne.s32.totalorder %s33, %s36
      %p42 = scmp.eq.s32.totalorder %s23, 0
      %p43 = por %p41, %p42
      %p44 = scmp.ne.s32.totalorder %s33, %s36
      %p45 = scmp.eq.s32.totalorder %s28, 1
      %p46 = por %p44, %p45
      %p47 = scmp.ne.s32.totalorder %s36, %s37
      %p48 = scmp.eq.s32.totalorder %s28, 0
      %p49 = por %p47, %p48
      %p50 = scmp.ne.s32.totalorder %s36, %s37
      %p51 = scmp.eq.s32.totalorder %s29, 1
      %p52 = por %p50, %p51
      %p54 = scmp.ne.s32.totalorder %s37, %s53
      %p55 = scmp.eq.s32.totalorder %s29, 0
      %p56 = por %p54, %p55
      %s57 = ssub.s32 %s23, %s30
      %p58 = scmp.eq.s32.totalorder %s57, 0
      %s60 = sadd.s32 %s59, 1
      %s61 = scalar_select %p58, %s59, %s60
      %p64 = pneg %p58
      %p65 = scmp.eq.s32.totalorder %s23, 1
      %p66 = por %p64, %p65
      %p67 = scmp.ne.s32.totalorder %s59, %s62
      %p68 = scmp.eq.s32.totalorder %s23, 0
      %p69 = por %p67, %p68
      %p70 = scmp.ne.s32.totalorder %s59, %s62
      %p71 = scmp.eq.s32.totalorder %s28, 1
      %p72 = por %p70, %p71
      %p73 = scmp.ne.s32.totalorder %s62, %s63
      %p74 = scmp.eq.s32.totalorder %s28, 0
      %p75 = por %p73, %p74
      %p76 = scmp.ne.s32.totalorder %s62, %s63
      %p77 = scmp.eq.s32.totalorder %s29, 1
      %p78 = por %p76, %p77
      %p80 = scmp.ne.s32.totalorder %s63, %s79
      %p81 = scmp.eq.s32.totalorder %s29, 0
      %p82 = por %p80, %p81
      %s84 = sadd.s32 %s83, 1
      %p87 = scmp.eq.s32.totalorder %s23, 1
      %p88 = scmp.ne.s32.totalorder %s83, %s85
      %p89 = scmp.eq.s32.totalorder %s23, 0
      %p90 = por %p88, %p89
      %p91 = scmp.ne.s32.totalorder %s83, %s85
      %p92 = scmp.eq.s32.totalorder %s28, 1
      %p93 = por %p91, %p92
      %p94 = scmp.ne.s32.totalorder %s85, %s86
      %p95 = scmp.eq.s32.totalorder %s28, 0
      %p96 = por %p94, %p95
      %p97 = scmp.ne.s32.totalorder %s85, %s86
      %p98 = scmp.eq.s32.totalorder %s29, 1
      %p99 = por %p97, %p98
      %p101 = scmp.ne.s32.totalorder %s86, %s100
      %p102 = scmp.eq.s32.totalorder %s29, 0
      %p103 = por %p101, %p102
      %s105 = sadd.s32 %s104, 1
      %p108 = scmp.eq.s32.totalorder %s23, 1
      %p109 = scmp.ne.s32.totalorder %s104, %s106
      %p110 = scmp.eq.s32.totalorder %s23, 0
      %p111 = por %p109, %p110
      %p112 = scmp.ne.s32.totalorder %s104, %s106
      %p113 = scmp.eq.s32.totalorder %s28, 1
      %p114 = por %p112, %p113
      %p115 = scmp.ne.s32.totalorder %s106, %s107
      %p116 = scmp.eq.s32.totalorder %s28, 0
      %p117 = por %p115, %p116
      %p118 = scmp.ne.s32.totalorder %s106, %s107
      %p119 = scmp.eq.s32.totalorder %s29, 1
      %p120 = por %p118, %p119
      %p122 = scmp.ne.s32.totalorder %s107, %s121
      %p123 = scmp.eq.s32.totalorder %s29, 0
      %p124 = por %p122, %p123
      %s126 = sadd.s32 %s125, 1
      %p129 = scmp.eq.s32.totalorder %s23, 1
      %p130 = scmp.ne.s32.totalorder %s125, %s127
      %p131 = scmp.eq.s32.totalorder %s23, 0
      %p132 = por %p130, %p131
      %p133 = scmp.ne.s32.totalorder %s125, %s127
      %p134 = scmp.eq.s32.totalorder %s28, 1
      %p135 = por %p133, %p134
      %p136 = scmp.ne.s32.totalorder %s127, %s128
      %p137 = scmp.eq.s32.totalorder %s28, 0
      %p138 = por %p136, %p137
      %p139 = scmp.ne.s32.totalorder %s127, %s128
      %p140 = scmp.eq.s32.totalorder %s29, 1
      %p141 = por %p139, %p140
      %p143 = scmp.ne.s32.totalorder %s128, %s142
      %p144 = scmp.eq.s32.totalorder %s29, 0
      %p145 = por %p143, %p144
      %s147 = sadd.s32 %s146, 1
      %p150 = scmp.eq.s32.totalorder %s23, 1
      %p151 = scmp.ne.s32.totalorder %s146, %s148
      %p152 = scmp.eq.s32.totalorder %s23, 0
      %p153 = por %p151, %p152
      %p154 = scmp.ne.s32.totalorder %s146, %s148
      %p155 = scmp.eq.s32.totalorder %s28, 1
      %p156 = por %p154, %p155
      %p157 = scmp.ne.s32.totalorder %s148, %s149
      %p158 = scmp.eq.s32.totalorder %s28, 0
      %p159 = por %p157, %p158
      %p160 = scmp.ne.s32.totalorder %s148, %s149
      %p161 = scmp.eq.s32.totalorder %s29, 1
      %p162 = por %p160, %p161
      %p164 = scmp.ne.s32.totalorder %s149, %s163
      %p165 = scmp.eq.s32.totalorder %s29, 0
      %p166 = por %p164, %p165
      %s168 = sadd.s32 %s167, 1
      %p171 = scmp.eq.s32.totalorder %s23, 1
      %p172 = scmp.ne.s32.totalorder %s167, %s169
      %p173 = scmp.eq.s32.totalorder %s23, 0
      %p174 = por %p172, %p173
      %p175 = scmp.ne.s32.totalorder %s167, %s169
      %p176 = scmp.eq.s32.totalorder %s28, 1
      %p177 = por %p175, %p176
      %p178 = scmp.ne.s32.totalorder %s169, %s170
      %p179 = scmp.eq.s32.totalorder %s28, 0
      %p180 = por %p178, %p179
      %p181 = scmp.ne.s32.totalorder %s169, %s170
      %p182 = scmp.eq.s32.totalorder %s29, 1
      %p183 = por %p181, %p182
      %p185 = scmp.ne.s32.totalorder %s170, %s184
      %p186 = scmp.eq.s32.totalorder %s29, 0
      %p187 = por %p185, %p186
      %s189 = sadd.s32 %s188, 1
      %p192 = scmp.eq.s32.totalorder %s23, 1
      %p193 = scmp.ne.s32.totalorder %s188, %s190
      %p194 = scmp.eq.s32.totalorder %s23, 0
      %p195 = por %p193, %p194
      %p196 = scmp.ne.s32.totalorder %s188, %s190
      %p197 = scmp.eq.s32.totalorder %s28, 1
      %p198 = por %p196, %p197
      %p199 = scmp.ne.s32.totalorder %s190, %s191
      %p200 = scmp.eq.s32.totalorder %s28, 0
      %p201 = por %p199, %p200
      %p202 = scmp.ne.s32.totalorder %s190, %s191
      %p203 = scmp.eq.s32.totalorder %s29, 1
      %p204 = por %p202, %p203
      %p206 = scmp.ne.s32.totalorder %s191, %s205
      %p207 = scmp.eq.s32.totalorder %s29, 0
      %p208 = por %p206, %p207
      %s210 = sadd.s32 %s209, 1
      %p213 = scmp.eq.s32.totalorder %s23, 1
      %p214 = scmp.ne.s32.totalorder %s209, %s211
      %p215 = scmp.eq.s32.totalorder %s23, 0
      %p216 = por %p214, %p215
      %p217 = scmp.ne.s32.totalorder %s209, %s211
      %p218 = scmp.eq.s32.totalorder %s28, 1
      %p219 = por %p217, %p218
      %p220 = scmp.ne.s32.totalorder %s211, %s212
      %p221 = scmp.eq.s32.totalorder %s28, 0
      %p222 = por %p220, %p221
      %p223 = scmp.ne.s32.totalorder %s211, %s212
      %p224 = scmp.eq.s32.totalorder %s29, 1
      %p225 = por %p223, %p224
      %p227 = scmp.ne.s32.totalorder %s212, %s226
      %p228 = scmp.eq.s32.totalorder %s29, 0
      %p229 = por %p227, %p228
      %s230 = ssub.s32 %s23, %s30
      %p231 = scmp.eq.s32.totalorder %s230, 0
      %s233 = sadd.s32 %s232, 1
      %s234 = scalar_select %p231, %s232, %s233
      %p237 = pneg %p231
      %p238 = scmp.eq.s32.totalorder %s23, 1
      %p239 = por %p237, %p238
      %p240 = scmp.ne.s32.totalorder %s232, %s235
      %p241 = scmp.eq.s32.totalorder %s23, 0
      %p242 = por %p240, %p241
      %p243 = scmp.ne.s32.totalorder %s232, %s235
      %p244 = scmp.eq.s32.totalorder %s28, 1
      %p245 = por %p243, %p244
      %p246 = scmp.ne.s32.totalorder %s235, %s236
      %p247 = scmp.eq.s32.totalorder %s28, 0
      %p248 = por %p246, %p247
      %p249 = scmp.ne.s32.totalorder %s235, %s236
      %p250 = scmp.eq.s32.totalorder %s29, 1
      %p251 = por %p249, %p250
      %p253 = scmp.ne.s32.totalorder %s236, %s252
      %p254 = scmp.eq.s32.totalorder %s29, 0
      %p255 = por %p253, %p254
      %p256 = scmp.le.s32.totalorder 1, %s23
      %p257 = scmp.lt.s32.totalorder %s23, 3
      %p258 = pnand %p256, %p257
      %p259 = pneg %p258
      // Predicated region
      $region9: #{tpu_custom_call.1} parent=5 // pred_check
        _
      $region10: #{tpu_custom_call.1} parent=5 // pred_check_branch
        %261 = sbr.rel (%p258) target = $region12
      $region11: #{tpu_custom_call.1} parent=5 // pred_region
        %s262 = ssub.s32 %s23, 1
        // Predicated region
        $region13: #{tpu_custom_call.1} parent=11 // pred_check
          %p263 = pneg %p96
        $region14: #{tpu_custom_call.1} parent=11 // pred_check_branch
          %265 = sbr.rel (%p263) target = $region16
        $region15: #{tpu_custom_call.1} parent=11 // pred_region
          _
        $region16: #{tpu_custom_call.1} parent=11 // pred_fallthru
          _
        // Predicated region
        $region17: #{tpu_custom_call.1} parent=11 // pred_check
          %p266 = pneg %p117
        $region18: #{tpu_custom_call.1} parent=11 // pred_check_branch
          %268 = sbr.rel (%p266) target = $region20
        $region19: #{tpu_custom_call.1} parent=11 // pred_region
          %s270 = ssub.s32 8192, 8192
          %271 = vsyncadd [#allocation6], %s270
          %s272 = sshll.u32 [#allocation5], 4
          %s273 = int_to_ptr.vmem [resolvable:$true] %s272
          %278 = dma.hbm_to_vmem [thread:$0]  %s3, 8192, %s273, [#allocation6], 256, 256, 16
        $region20: #{tpu_custom_call.1} parent=11 // pred_fallthru
          _
        // Predicated region
        $region21: #{tpu_custom_call.1} parent=11 // pred_check
          %p279 = pneg %p138
        $region22: #{tpu_custom_call.1} parent=11 // pred_check_branch
          %281 = sbr.rel (%p279) target = $region24
        $region23: #{tpu_custom_call.1} parent=11 // pred_region
          _
        $region24: #{tpu_custom_call.1} parent=11 // pred_fallthru
          _
        // Predicated region
        $region25: #{tpu_custom_call.1} parent=11 // pred_check
          %p282 = pneg %p159
        $region26: #{tpu_custom_call.1} parent=11 // pred_check_branch
          %284 = sbr.rel (%p282) target = $region28
        $region27: #{tpu_custom_call.1} parent=11 // pred_region
          %s286 = ssub.s32 8192, 8192
          %287 = vsyncadd [#allocation6], %s286
          %s288 = sshll.u32 [#allocation7], 4
          %s289 = int_to_ptr.vmem [resolvable:$true] %s288
          %294 = dma.hbm_to_vmem [thread:$0]  %s5, 8192, %s289, [#allocation6], 128, 128, 8
        $region28: #{tpu_custom_call.1} parent=11 // pred_fallthru
          _
        // Predicated region
        $region29: #{tpu_custom_call.1} parent=11 // pred_check
          %p295 = pneg %p180
        $region30: #{tpu_custom_call.1} parent=11 // pred_check_branch
          %297 = sbr.rel (%p295) target = $region32
        $region31: #{tpu_custom_call.1} parent=11 // pred_region
          _
        $region32: #{tpu_custom_call.1} parent=11 // pred_fallthru
          _
        // Predicated region
        $region33: #{tpu_custom_call.1} parent=11 // pred_check
          %p298 = pneg %p201
        $region34: #{tpu_custom_call.1} parent=11 // pred_check_branch
          %300 = sbr.rel (%p298) target = $region36
        $region35: #{tpu_custom_call.1} parent=11 // pred_region
          %s302 = ssub.s32 2048, 2048
          %303 = vsyncadd [#allocation9], %s302
          %s304 = sshll.u32 [#allocation8], 4
          %s305 = int_to_ptr.vmem [resolvable:$true] %s304
          %310 = dma.hbm_to_vmem [thread:$0]  %s7, 2048, %s305, [#allocation9], 64, 64, 4
        $region36: #{tpu_custom_call.1} parent=11 // pred_fallthru
          _
        // Predicated region
        $region37: #{tpu_custom_call.1} parent=11 // pred_check
          %p311 = pneg %p222
        $region38: #{tpu_custom_call.1} parent=11 // pred_check_branch
          %313 = sbr.rel (%p311) target = $region40
        $region39: #{tpu_custom_call.1} parent=11 // pred_region
          _
        $region40: #{tpu_custom_call.1} parent=11 // pred_fallthru
          _
      $region12: #{tpu_custom_call.1} parent=5 // pred_fallthru
        _
      %p314 = scmp.lt.s32.totalorder %s23, 2
      // Predicated region
      $region41: #{tpu_custom_call.1} parent=5 // pred_check
        %p315 = pneg %p314
      $region42: #{tpu_custom_call.1} parent=5 // pred_check_branch
        %317 = sbr.rel (%p315) target = $region44
      $region43: #{tpu_custom_call.1} parent=5 // pred_region
        // Predicated region
        $region45: #{tpu_custom_call.1} parent=43 // pred_check
          %p318 = pneg %p43
        $region46: #{tpu_custom_call.1} parent=43 // pred_check_branch
          %320 = sbr.rel (%p318) target = $region48
        $region47: #{tpu_custom_call.1} parent=43 // pred_region
          %s321 = smul.u32 16, %s23
          %p322 = scmp.lt.s32.totalorder %s321, 31
          %s323 = scalar_select %p322, %s321, 31
          %s324 = smul.addr %s323, 4
          %s325 = scalar_lea.vmem %s0, %s324
          %s326 = smul.u32 16, %s23
        $region48: #{tpu_custom_call.1} parent=43 // pred_fallthru
          _
        // Predicated region
        $region49: #{tpu_custom_call.1} parent=43 // pred_check
          %p327 = pneg %p69
        $region50: #{tpu_custom_call.1} parent=43 // pred_check_branch
          %329 = sbr.rel (%p327) target = $region52
        $region51: #{tpu_custom_call.1} parent=43 // pred_region
          %s330 = sand.u32 %s59, 1
          %s331 = scalar_lea.sflag [#allocation3], %s330
          %s332 = sand.u32 %s59, 1
          %s333 = smul.addr %s332, 128
          %s334 = scalar_lea.vmem [#allocation2], %s333
          %s335 = smul.u32 16, %s23
          %s337 = ssub.s32 2048, 2048
          %338 = vsyncadd %s331, %s337
          %s339 = smul.addr %s335, 2
          %s340 = smul.addr %s339, 64
          %s341 = scalar_lea.hbm %s1, %s340
          %s342 = sshll.u32 %s334, 4
          %s343 = int_to_ptr.vmem [resolvable:$true] %s342
          %348 = dma.hbm_to_vmem [thread:$0]  %s341, 2048, %s343, %s331, 128, 128, 8
        $region52: #{tpu_custom_call.1} parent=43 // pred_fallthru
          _
      $region44: #{tpu_custom_call.1} parent=5 // pred_fallthru
        _
      %p349 = scmp.le.s32.totalorder 1, %s23
      %p350 = scmp.lt.s32.totalorder %s23, 3
      %p351 = pnand %p349, %p350
      %p352 = pneg %p351
      // Predicated region
      $region53: #{tpu_custom_call.1} parent=5 // pred_check
        _
      $region54: #{tpu_custom_call.1} parent=5 // pred_check_branch
        %354 = sbr.rel (%p351) target = $region56
      $region55: #{tpu_custom_call.1} parent=5 // pred_region
        %s355 = ssub.s32 %s23, 1
        %s356 = sand.u32 %s62, 1
        %s357 = scalar_lea.sflag [#allocation3], %s356
        %s358 = sand.u32 %s62, 1
        %s359 = smul.addr %s358, 128
        %s360 = scalar_lea.vmem [#allocation2], %s359
        // Predicated region
        $region57: #{tpu_custom_call.1} parent=55 // pred_check
          %p361 = pneg %p75
        $region58: #{tpu_custom_call.1} parent=55 // pred_check_branch
          %363 = sbr.rel (%p361) target = $region60
        $region59: #{tpu_custom_call.1} parent=55 // pred_region
          %364 = dma.done %s357, 2048
        $region60: #{tpu_custom_call.1} parent=55 // pred_fallthru
          _
        // Predicated region
        $region61: #{tpu_custom_call.1} parent=55 // pred_check
          %p365 = pneg %p117
        $region62: #{tpu_custom_call.1} parent=55 // pred_check_branch
          %367 = sbr.rel (%p365) target = $region64
        $region63: #{tpu_custom_call.1} parent=55 // pred_region
          %368 = dma.done [#allocation6], 8192
        $region64: #{tpu_custom_call.1} parent=55 // pred_fallthru
          _
        // Predicated region
        $region65: #{tpu_custom_call.1} parent=55 // pred_check
          %p369 = pneg %p159
        $region66: #{tpu_custom_call.1} parent=55 // pred_check_branch
          %371 = sbr.rel (%p369) target = $region68
        $region67: #{tpu_custom_call.1} parent=55 // pred_region
          %372 = dma.done [#allocation6], 8192
        $region68: #{tpu_custom_call.1} parent=55 // pred_fallthru
          _
        // Predicated region
        $region69: #{tpu_custom_call.1} parent=55 // pred_check
          %p373 = pneg %p201
        $region70: #{tpu_custom_call.1} parent=55 // pred_check_branch
          %375 = sbr.rel (%p373) target = $region72
        $region71: #{tpu_custom_call.1} parent=55 // pred_region
          %376 = dma.done [#allocation9], 2048
        $region72: #{tpu_custom_call.1} parent=55 // pred_fallthru
          _
        %s377 = smul.u32 16, %s28
        %p378 = scmp.lt.s32.totalorder %s377, 31
        %s379 = scalar_select %p378, %s377, 31
        %s380 = smul.addr %s379, 4
        %s381 = scalar_lea.vmem %s0, %s380
        %p382 = pneg %p49
        %p383 = pneg %p46
        %s384 = sand.u32 %s62, 1
        %s385 = scalar_lea.sflag [#allocation3], %s384
        %s386 = sand.u32 %s62, 1
        %s387 = smul.addr %s386, 128
        %s388 = scalar_lea.vmem [#allocation2], %s387
        %p389 = pneg %p75
        %p390 = pneg %p72
        %p391 = pneg %p96
        %p392 = pneg %p93
        %p393 = pneg %p117
        %p394 = pneg %p114
        %p395 = pneg %p138
        %p396 = pneg %p135
        %p397 = pneg %p159
        %p398 = pneg %p156
        %p399 = pneg %p180
        %p400 = pneg %p177
        %p401 = pneg %p201
        %p402 = pneg %p198
        %p403 = pneg %p222
        %p404 = pneg %p219
        %p405 = pneg %p248
        %p406 = pneg %p245
        %s407 = sand.u32 %s235, 1
        %s408 = scalar_lea.sflag [#allocation4], %s407
        %s409 = sand.u32 %s235, 1
        %s410 = smul.addr %s409, 128
        %s411 = scalar_lea.vmem [#allocation10], %s410
        %s412 = smul.u32 16, %s28
        %p413 = scmp.lt.s32.totalorder %s412, 31
        %s414 = scalar_select %p413, %s412, 31
        %s415 = smul.addr %s414, 4
        %s416 = scalar_lea.vmem %s0, %s415
        %s417 = smul.u32 16, %s28
        %s418 = smul.u32 16, %s28
        %s419 = smul.u32 16, %s28
        %v421 = vld [vmem:[%s416] sm:$0xf]
        %v422 = vld [vmem:[%s416 + $0x4] sm:$0xf]
        %v423 = vld [vmem:[%s416 + $0x8] sm:$0xf]
        %v424 = vld [vmem:[%s416 + $0xc] sm:$0xf]
        %v425 = vld [vmem:[%s416 + $0x10] sm:$0xf]
        %v426 = vld [vmem:[%s416 + $0x14] sm:$0xf]
        %v427 = vld [vmem:[%s416 + $0x18] sm:$0xf]
        %v428 = vld [vmem:[%s416 + $0x1c] sm:$0xf]
        %v429 = vld [vmem:[%s416 + $0x20] sm:$0xf]
        %v430 = vld [vmem:[%s416 + $0x24] sm:$0xf]
        %v431 = vld [vmem:[%s416 + $0x28] sm:$0xf]
        %v432 = vld [vmem:[%s416 + $0x2c] sm:$0xf]
        %v433 = vld [vmem:[%s416 + $0x30] sm:$0xf]
        %v434 = vld [vmem:[%s416 + $0x34] sm:$0xf]
        %v435 = vld [vmem:[%s416 + $0x38] sm:$0xf]
        %v436 = vld [vmem:[%s416 + $0x3c] sm:$0xf]
        %v437 = vld [vmem:[%s2] sm:$0xff]
        %v438 = vld [vmem:[%s2 + $0x8] sm:$0xff]
        %v439 = vld [vmem:[%s2 + $0x10] sm:$0xff]
        %v440 = vld [vmem:[%s2 + $0x18] sm:$0xff]
        %v441 = vld [vmem:[%s2 + $0x20] sm:$0xff]
        %v442 = vld [vmem:[%s2 + $0x28] sm:$0xff]
        %v443 = vld [vmem:[%s2 + $0x30] sm:$0xff]
        %v444 = vld [vmem:[%s2 + $0x38] sm:$0xff]
        %v445 = vld [vmem:[%s2 + $0x40] sm:$0xff]
        %v446 = vld [vmem:[%s2 + $0x48] sm:$0xff]
        %v447 = vld [vmem:[%s2 + $0x50] sm:$0xff]
        %v448 = vld [vmem:[%s2 + $0x58] sm:$0xff]
        %v449 = vld [vmem:[%s2 + $0x60] sm:$0xff]
        %v450 = vld [vmem:[%s2 + $0x68] sm:$0xff]
        %v451 = vld [vmem:[%s2 + $0x70] sm:$0xff]
        %v452 = vld [vmem:[%s2 + $0x78] sm:$0xff]
        %v453 = vld [vmem:[%s360] sm:$0xff]
        %v454 = vld [vmem:[%s360 + $0x8] sm:$0xff]
        %v455 = vld [vmem:[%s360 + $0x10] sm:$0xff]
        %v456 = vld [vmem:[%s360 + $0x18] sm:$0xff]
        %v457 = vld [vmem:[%s360 + $0x20] sm:$0xff]
        %v458 = vld [vmem:[%s360 + $0x28] sm:$0xff]
        %v459 = vld [vmem:[%s360 + $0x30] sm:$0xff]
        %v460 = vld [vmem:[%s360 + $0x38] sm:$0xff]
        %v461 = vld [vmem:[%s360 + $0x40] sm:$0xff]
        %v462 = vld [vmem:[%s360 + $0x48] sm:$0xff]
        %v463 = vld [vmem:[%s360 + $0x50] sm:$0xff]
        %v464 = vld [vmem:[%s360 + $0x58] sm:$0xff]
        %v465 = vld [vmem:[%s360 + $0x60] sm:$0xff]
        %v466 = vld [vmem:[%s360 + $0x68] sm:$0xff]
        %v467 = vld [vmem:[%s360 + $0x70] sm:$0xff]
        %v468 = vld [vmem:[%s360 + $0x78] sm:$0xff]
        %v469 = vld [vmem:[#allocation5] sm:$0xff]
        %v470 = vld [vmem:[#allocation5 + $0x8] sm:$0xff]
        %v471 = vld [vmem:[#allocation5 + $0x10] sm:$0xff]
        %v472 = vld [vmem:[#allocation5 + $0x18] sm:$0xff]
        %v473 = vld [vmem:[#allocation5 + $0x20] sm:$0xff]
        %v474 = vld [vmem:[#allocation5 + $0x28] sm:$0xff]
        %v475 = vld [vmem:[#allocation5 + $0x30] sm:$0xff]
        %v476 = vld [vmem:[#allocation5 + $0x38] sm:$0xff]
        %v477 = vld [vmem:[#allocation5 + $0x40] sm:$0xff]
        %v478 = vld [vmem:[#allocation5 + $0x48] sm:$0xff]
        %v479 = vld [vmem:[#allocation5 + $0x50] sm:$0xff]
        %v480 = vld [vmem:[#allocation5 + $0x58] sm:$0xff]
        %v481 = vld [vmem:[#allocation5 + $0x60] sm:$0xff]
        %v482 = vld [vmem:[#allocation5 + $0x68] sm:$0xff]
        %v483 = vld [vmem:[#allocation5 + $0x70] sm:$0xff]
        %v484 = vld [vmem:[#allocation5 + $0x78] sm:$0xff]
        %v485 = vld [vmem:[#allocation5 + $0x80] sm:$0xff]
        %v486 = vld [vmem:[#allocation5 + $0x88] sm:$0xff]
        %v487 = vld [vmem:[#allocation5 + $0x90] sm:$0xff]
        %v488 = vld [vmem:[#allocation5 + $0x98] sm:$0xff]
        %v489 = vld [vmem:[#allocation5 + $0xa0] sm:$0xff]
        %v490 = vld [vmem:[#allocation5 + $0xa8] sm:$0xff]
        %v491 = vld [vmem:[#allocation5 + $0xb0] sm:$0xff]
        %v492 = vld [vmem:[#allocation5 + $0xb8] sm:$0xff]
        %v493 = vld [vmem:[#allocation5 + $0xc0] sm:$0xff]
        %v494 = vld [vmem:[#allocation5 + $0xc8] sm:$0xff]
        %v495 = vld [vmem:[#allocation5 + $0xd0] sm:$0xff]
        %v496 = vld [vmem:[#allocation5 + $0xd8] sm:$0xff]
        %v497 = vld [vmem:[#allocation5 + $0xe0] sm:$0xff]
        %v498 = vld [vmem:[#allocation5 + $0xe8] sm:$0xff]
        %v499 = vld [vmem:[#allocation5 + $0xf0] sm:$0xff]
        %v500 = vld [vmem:[#allocation5 + $0xf8] sm:$0xff]
        %v501 = vld [vmem:[#allocation5 + $0x100] sm:$0xff]
        %v502 = vld [vmem:[#allocation5 + $0x108] sm:$0xff]
        %v503 = vld [vmem:[#allocation5 + $0x110] sm:$0xff]
        %v504 = vld [vmem:[#allocation5 + $0x118] sm:$0xff]
        %v505 = vld [vmem:[#allocation5 + $0x120] sm:$0xff]
        %v506 = vld [vmem:[#allocation5 + $0x128] sm:$0xff]
        %v507 = vld [vmem:[#allocation5 + $0x130] sm:$0xff]
        %v508 = vld [vmem:[#allocation5 + $0x138] sm:$0xff]
        %v509 = vld [vmem:[#allocation5 + $0x140] sm:$0xff]
        %v510 = vld [vmem:[#allocation5 + $0x148] sm:$0xff]
        %v511 = vld [vmem:[#allocation5 + $0x150] sm:$0xff]
        %v512 = vld [vmem:[#allocation5 + $0x158] sm:$0xff]
        %v513 = vld [vmem:[#allocation5 + $0x160] sm:$0xff]
        %v514 = vld [vmem:[#allocation5 + $0x168] sm:$0xff]
        %v515 = vld [vmem:[#allocation5 + $0x170] sm:$0xff]
        %v516 = vld [vmem:[#allocation5 + $0x178] sm:$0xff]
        %v517 = vld [vmem:[#allocation5 + $0x180] sm:$0xff]
        %v518 = vld [vmem:[#allocation5 + $0x188] sm:$0xff]
        %v519 = vld [vmem:[#allocation5 + $0x190] sm:$0xff]
        %v520 = vld [vmem:[#allocation5 + $0x198] sm:$0xff]
        %v521 = vld [vmem:[#allocation5 + $0x1a0] sm:$0xff]
        %v522 = vld [vmem:[#allocation5 + $0x1a8] sm:$0xff]
        %v523 = vld [vmem:[#allocation5 + $0x1b0] sm:$0xff]
        %v524 = vld [vmem:[#allocation5 + $0x1b8] sm:$0xff]
        %v525 = vld [vmem:[#allocation5 + $0x1c0] sm:$0xff]
        %v526 = vld [vmem:[#allocation5 + $0x1c8] sm:$0xff]
        %v527 = vld [vmem:[#allocation5 + $0x1d0] sm:$0xff]
        %v528 = vld [vmem:[#allocation5 + $0x1d8] sm:$0xff]
        %v529 = vld [vmem:[#allocation5 + $0x1e0] sm:$0xff]
        %v530 = vld [vmem:[#allocation5 + $0x1e8] sm:$0xff]
        %v531 = vld [vmem:[#allocation5 + $0x1f0] sm:$0xff]
        %v532 = vld [vmem:[#allocation5 + $0x1f8] sm:$0xff]
        %v549 = vunpack.c.l.b16 %v453
        %v550 = vunpack.c.h.b16 %v453
        %v551 = vunpack.c.l.b16 %v454
        %v552 = vunpack.c.h.b16 %v454
        %v553 = vunpack.c.l.b16 %v455
        %v554 = vunpack.c.h.b16 %v455
        %v555 = vunpack.c.l.b16 %v456
        %v556 = vunpack.c.h.b16 %v456
        %v557 = vunpack.c.l.b16 %v457
        %v558 = vunpack.c.h.b16 %v457
        %v559 = vunpack.c.l.b16 %v458
        %v560 = vunpack.c.h.b16 %v458
        %v561 = vunpack.c.l.b16 %v459
        %v562 = vunpack.c.h.b16 %v459
        %v563 = vunpack.c.l.b16 %v460
        %v564 = vunpack.c.h.b16 %v460
        %v565 = vunpack.c.l.b16 %v461
        %v566 = vunpack.c.h.b16 %v461
        %v567 = vunpack.c.l.b16 %v462
        %v568 = vunpack.c.h.b16 %v462
        %v569 = vunpack.c.l.b16 %v463
        %v570 = vunpack.c.h.b16 %v463
        %v571 = vunpack.c.l.b16 %v464
        %v572 = vunpack.c.h.b16 %v464
        %v573 = vunpack.c.l.b16 %v465
        %v574 = vunpack.c.h.b16 %v465
        %v575 = vunpack.c.l.b16 %v466
        %v576 = vunpack.c.h.b16 %v466
        %v577 = vunpack.c.l.b16 %v467
        %v578 = vunpack.c.h.b16 %v467
        %v579 = vunpack.c.l.b16 %v468
        %v580 = vunpack.c.h.b16 %v468
        %v581 = vpack.c.b16 %v551, %v549
        %v582 = vpack.c.b16 %v552, %v550
        %v583 = vpack.c.b16 %v555, %v553
        %v584 = vpack.c.b16 %v556, %v554
        %v585 = vpack.c.b16 %v559, %v557
        %v586 = vpack.c.b16 %v560, %v558
        %v587 = vpack.c.b16 %v563, %v561
        %v588 = vpack.c.b16 %v564, %v562
        %v589 = vpack.c.b16 %v567, %v565
        %v590 = vpack.c.b16 %v568, %v566
        %v591 = vpack.c.b16 %v571, %v569
        %v592 = vpack.c.b16 %v572, %v570
        %v593 = vpack.c.b16 %v575, %v573
        %v594 = vpack.c.b16 %v576, %v574
        %v595 = vpack.c.b16 %v579, %v577
        %v596 = vpack.c.b16 %v580, %v578
        %v677 = vunpack.c.l.b16 %v469
        %v678 = vunpack.c.h.b16 %v469
        %v679 = vunpack.c.l.b16 %v470
        %v680 = vunpack.c.h.b16 %v470
        %v681 = vunpack.c.l.b16 %v471
        %v682 = vunpack.c.h.b16 %v471
        %v683 = vunpack.c.l.b16 %v472
        %v684 = vunpack.c.h.b16 %v472
        %v685 = vunpack.c.l.b16 %v473
        %v686 = vunpack.c.h.b16 %v473
        %v687 = vunpack.c.l.b16 %v474
        %v688 = vunpack.c.h.b16 %v474
        %v689 = vunpack.c.l.b16 %v475
        %v690 = vunpack.c.h.b16 %v475
        %v691 = vunpack.c.l.b16 %v476
        %v692 = vunpack.c.h.b16 %v476
        %v693 = vunpack.c.l.b16 %v477
        %v694 = vunpack.c.h.b16 %v477
        %v695 = vunpack.c.l.b16 %v478
        %v696 = vunpack.c.h.b16 %v478
        %v697 = vunpack.c.l.b16 %v479
        %v698 = vunpack.c.h.b16 %v479
        %v699 = vunpack.c.l.b16 %v480
        %v700 = vunpack.c.h.b16 %v480
        %v701 = vunpack.c.l.b16 %v481
        %v702 = vunpack.c.h.b16 %v481
        %v703 = vunpack.c.l.b16 %v482
        %v704 = vunpack.c.h.b16 %v482
        %v705 = vunpack.c.l.b16 %v483
        %v706 = vunpack.c.h.b16 %v483
        %v707 = vunpack.c.l.b16 %v484
        %v708 = vunpack.c.h.b16 %v484
        %v709 = vunpack.c.l.b16 %v485
        %v710 = vunpack.c.h.b16 %v485
        %v711 = vunpack.c.l.b16 %v486
        %v712 = vunpack.c.h.b16 %v486
        %v713 = vunpack.c.l.b16 %v487
        %v714 = vunpack.c.h.b16 %v487
        %v715 = vunpack.c.l.b16 %v488
        %v716 = vunpack.c.h.b16 %v488
        %v717 = vunpack.c.l.b16 %v489
        %v718 = vunpack.c.h.b16 %v489
        %v719 = vunpack.c.l.b16 %v490
        %v720 = vunpack.c.h.b16 %v490
        %v721 = vunpack.c.l.b16 %v491
        %v722 = vunpack.c.h.b16 %v491
        %v723 = vunpack.c.l.b16 %v492
        %v724 = vunpack.c.h.b16 %v492
        %v725 = vunpack.c.l.b16 %v493
        %v726 = vunpack.c.h.b16 %v493
        %v727 = vunpack.c.l.b16 %v494
        %v728 = vunpack.c.h.b16 %v494
        %v729 = vunpack.c.l.b16 %v495
        %v730 = vunpack.c.h.b16 %v495
        %v731 = vunpack.c.l.b16 %v496
        %v732 = vunpack.c.h.b16 %v496
        %v733 = vunpack.c.l.b16 %v497
        %v734 = vunpack.c.h.b16 %v497
        %v735 = vunpack.c.l.b16 %v498
        %v736 = vunpack.c.h.b16 %v498
        %v737 = vunpack.c.l.b16 %v499
        %v738 = vunpack.c.h.b16 %v499
        %v739 = vunpack.c.l.b16 %v500
        %v740 = vunpack.c.h.b16 %v500
        %v741 = vunpack.c.l.b16 %v501
        %v742 = vunpack.c.h.b16 %v501
        %v743 = vunpack.c.l.b16 %v502
        %v744 = vunpack.c.h.b16 %v502
        %v745 = vunpack.c.l.b16 %v503
        %v746 = vunpack.c.h.b16 %v503
        %v747 = vunpack.c.l.b16 %v504
        %v748 = vunpack.c.h.b16 %v504
        %v749 = vunpack.c.l.b16 %v505
        %v750 = vunpack.c.h.b16 %v505
        %v751 = vunpack.c.l.b16 %v506
        %v752 = vunpack.c.h.b16 %v506
        %v753 = vunpack.c.l.b16 %v507
        %v754 = vunpack.c.h.b16 %v507
        %v755 = vunpack.c.l.b16 %v508
        %v756 = vunpack.c.h.b16 %v508
        %v757 = vunpack.c.l.b16 %v509
        %v758 = vunpack.c.h.b16 %v509
        %v759 = vunpack.c.l.b16 %v510
        %v760 = vunpack.c.h.b16 %v510
        %v761 = vunpack.c.l.b16 %v511
        %v762 = vunpack.c.h.b16 %v511
        %v763 = vunpack.c.l.b16 %v512
        %v764 = vunpack.c.h.b16 %v512
        %v765 = vunpack.c.l.b16 %v513
        %v766 = vunpack.c.h.b16 %v513
        %v767 = vunpack.c.l.b16 %v514
        %v768 = vunpack.c.h.b16 %v514
        %v769 = vunpack.c.l.b16 %v515
        %v770 = vunpack.c.h.b16 %v515
        %v771 = vunpack.c.l.b16 %v516
        %v772 = vunpack.c.h.b16 %v516
        %v773 = vunpack.c.l.b16 %v517
        %v774 = vunpack.c.h.b16 %v517
        %v775 = vunpack.c.l.b16 %v518
        %v776 = vunpack.c.h.b16 %v518
        %v777 = vunpack.c.l.b16 %v519
        %v778 = vunpack.c.h.b16 %v519
        %v779 = vunpack.c.l.b16 %v520
        %v780 = vunpack.c.h.b16 %v520
        %v781 = vunpack.c.l.b16 %v521
        %v782 = vunpack.c.h.b16 %v521
        %v783 = vunpack.c.l.b16 %v522
        %v784 = vunpack.c.h.b16 %v522
        %v785 = vunpack.c.l.b16 %v523
        %v786 = vunpack.c.h.b16 %v523
        %v787 = vunpack.c.l.b16 %v524
        %v788 = vunpack.c.h.b16 %v524
        %v789 = vunpack.c.l.b16 %v525
        %v790 = vunpack.c.h.b16 %v525
        %v791 = vunpack.c.l.b16 %v526
        %v792 = vunpack.c.h.b16 %v526
        %v793 = vunpack.c.l.b16 %v527
        %v794 = vunpack.c.h.b16 %v527
        %v795 = vunpack.c.l.b16 %v528
        %v796 = vunpack.c.h.b16 %v528
        %v797 = vunpack.c.l.b16 %v529
        %v798 = vunpack.c.h.b16 %v529
        %v799 = vunpack.c.l.b16 %v530
        %v800 = vunpack.c.h.b16 %v530
        %v801 = vunpack.c.l.b16 %v531
        %v802 = vunpack.c.h.b16 %v531
        %v803 = vunpack.c.l.b16 %v532
        %v804 = vunpack.c.h.b16 %v532
        %v805 = vpack.c.b16 %v681, %v677
        %v806 = vpack.c.b16 %v682, %v678
        %v807 = vpack.c.b16 %v683, %v679
        %v808 = vpack.c.b16 %v684, %v680
        %v809 = vpack.c.b16 %v689, %v685
        %v810 = vpack.c.b16 %v690, %v686
        %v811 = vpack.c.b16 %v691, %v687
        %v812 = vpack.c.b16 %v692, %v688
        %v813 = vpack.c.b16 %v697, %v693
        %v814 = vpack.c.b16 %v698, %v694
        %v815 = vpack.c.b16 %v699, %v695
        %v816 = vpack.c.b16 %v700, %v696
        %v817 = vpack.c.b16 %v705, %v701
        %v818 = vpack.c.b16 %v706, %v702
        %v819 = vpack.c.b16 %v707, %v703
        %v820 = vpack.c.b16 %v708, %v704
        %v821 = vpack.c.b16 %v713, %v709
        %v822 = vpack.c.b16 %v714, %v710
        %v823 = vpack.c.b16 %v715, %v711
        %v824 = vpack.c.b16 %v716, %v712
        %v825 = vpack.c.b16 %v721, %v717
        %v826 = vpack.c.b16 %v722, %v718
        %v827 = vpack.c.b16 %v723, %v719
        %v828 = vpack.c.b16 %v724, %v720
        %v829 = vpack.c.b16 %v729, %v725
        %v830 = vpack.c.b16 %v730, %v726
        %v831 = vpack.c.b16 %v731, %v727
        %v832 = vpack.c.b16 %v732, %v728
        %v833 = vpack.c.b16 %v737, %v733
        %v834 = vpack.c.b16 %v738, %v734
        %v835 = vpack.c.b16 %v739, %v735
        %v836 = vpack.c.b16 %v740, %v736
        %v837 = vpack.c.b16 %v745, %v741
        %v838 = vpack.c.b16 %v746, %v742
        %v839 = vpack.c.b16 %v747, %v743
        %v840 = vpack.c.b16 %v748, %v744
        %v841 = vpack.c.b16 %v753, %v749
        %v842 = vpack.c.b16 %v754, %v750
        %v843 = vpack.c.b16 %v755, %v751
        %v844 = vpack.c.b16 %v756, %v752
        %v845 = vpack.c.b16 %v761, %v757
        %v846 = vpack.c.b16 %v762, %v758
        %v847 = vpack.c.b16 %v763, %v759
        %v848 = vpack.c.b16 %v764, %v760
        %v849 = vpack.c.b16 %v769, %v765
        %v850 = vpack.c.b16 %v770, %v766
        %v851 = vpack.c.b16 %v771, %v767
        %v852 = vpack.c.b16 %v772, %v768
        %v853 = vpack.c.b16 %v777, %v773
        %v854 = vpack.c.b16 %v778, %v774
        %v855 = vpack.c.b16 %v779, %v775
        %v856 = vpack.c.b16 %v780, %v776
        %v857 = vpack.c.b16 %v785, %v781
        %v858 = vpack.c.b16 %v786, %v782
        %v859 = vpack.c.b16 %v787, %v783
        %v860 = vpack.c.b16 %v788, %v784
        %v861 = vpack.c.b16 %v793, %v789
        %v862 = vpack.c.b16 %v794, %v790
        %v863 = vpack.c.b16 %v795, %v791
        %v864 = vpack.c.b16 %v796, %v792
        %v865 = vpack.c.b16 %v801, %v797
        %v866 = vpack.c.b16 %v802, %v798
        %v867 = vpack.c.b16 %v803, %v799
        %v868 = vpack.c.b16 %v804, %v800
        %933 = vmatprep.subr.bf16.mxu0 %v806
        %934 = vmatpush1.bf16.msra.mxu0 %v805
        %935 = vmatprep.subr.bf16.mxu0 %v810
        %936 = vmatpush1.bf16.msra.mxu0 %v809
        %937 = vmatprep.subr.bf16.mxu0 %v814
        %938 = vmatpush1.bf16.msra.mxu0 %v813
        %939 = vmatprep.subr.bf16.mxu0 %v818
        %940 = vmatpush1.bf16.msra.mxu0 %v817
        %941 = vmatprep.subr.bf16.mxu0 %v822
        %942 = vmatpush1.bf16.msra.mxu0 %v821
        %943 = vmatprep.subr.bf16.mxu0 %v826
        %944 = vmatpush1.bf16.msra.mxu0 %v825
        %945 = vmatprep.subr.bf16.mxu0 %v830
        %946 = vmatpush1.bf16.msra.mxu0 %v829
        %947 = vmatprep.subr.bf16.mxu0 %v834
        %948 = vmatpush1.bf16.msra.mxu0 %v833
        %949 = vmatprep.subr.bf16.mxu0 %v838
        %950 = vmatpush1.bf16.msra.mxu0 %v837
        %951 = vmatprep.subr.bf16.mxu0 %v842
        %952 = vmatpush1.bf16.msra.mxu0 %v841
        %953 = vmatprep.subr.bf16.mxu0 %v846
        %954 = vmatpush1.bf16.msra.mxu0 %v845
        %955 = vmatprep.subr.bf16.mxu0 %v850
        %956 = vmatpush1.bf16.msra.mxu0 %v849
        %957 = vmatprep.subr.bf16.mxu0 %v854
        %958 = vmatpush1.bf16.msra.mxu0 %v853
        %959 = vmatprep.subr.bf16.mxu0 %v858
        %960 = vmatpush1.bf16.msra.mxu0 %v857
        %961 = vmatprep.subr.bf16.mxu0 %v862
        %962 = vmatpush1.bf16.msra.mxu0 %v861
        %963 = vmatprep.subr.bf16.mxu0 %v866
        %964 = vmatpush1.bf16.msra.mxu0 %v865
        %965 = vmatprep.mubr.bf16.mxu0 %v582
        %966 = vmatmul.mubr.bf16.gmra.mrb[0].mxu0 %v581
        %v967 = vpop.f32.mrb[0].mxu0
        %v968 = vadd.f32 0.0, %v967
        %v969 = vpop.f32.mrb[0].mxu0
        %v970 = vadd.f32 0.0, %v969
        %v971 = vpop.f32.mrb[0].mxu0
        %v972 = vadd.f32 0.0, %v971
        %v973 = vpop.f32.mrb[0].mxu0
        %v974 = vadd.f32 0.0, %v973
        %975 = vmatprep.mubr.bf16.mxu0 %v584
        %976 = vmatmul.mubr.bf16.gmra.mrb[0].mxu0 %v583
        %v977 = vpop.f32.mrb[0].mxu0
        %v978 = vadd.f32 0.0, %v977
        %v979 = vpop.f32.mrb[0].mxu0
        %v980 = vadd.f32 0.0, %v979
        %v981 = vpop.f32.mrb[0].mxu0
        %v982 = vadd.f32 0.0, %v981
        %v983 = vpop.f32.mrb[0].mxu0
        %v984 = vadd.f32 0.0, %v983
        %985 = vmatprep.mubr.bf16.mxu0 %v586
        %986 = vmatmul.mubr.bf16.gmra.mrb[0].mxu0 %v585
        %v987 = vpop.f32.mrb[0].mxu0
        %v988 = vadd.f32 0.0, %v987
        %v989 = vpop.f32.mrb[0].mxu0
        %v990 = vadd.f32 0.0, %v989
        %v991 = vpop.f32.mrb[0].mxu0
        %v992 = vadd.f32 0.0, %v991
        %v993 = vpop.f32.mrb[0].mxu0
        %v994 = vadd.f32 0.0, %v993
        %995 = vmatprep.mubr.bf16.mxu0 %v588
        %996 = vmatmul.mubr.bf16.gmra.mrb[0].mxu0 %v587
        %v997 = vpop.f32.mrb[0].mxu0
        %v998 = vadd.f32 0.0, %v997
        %v999 = vpop.f32.mrb[0].mxu0
        %v1000 = vadd.f32 0.0, %v999
        %v1001 = vpop.f32.mrb[0].mxu0
        %v1002 = vadd.f32 0.0, %v1001
        %v1003 = vpop.f32.mrb[0].mxu0
        %v1004 = vadd.f32 0.0, %v1003
        %1005 = vmatprep.mubr.bf16.mxu0 %v590
        %1006 = vmatmul.mubr.bf16.gmra.mrb[0].mxu0 %v589
        %v1007 = vpop.f32.mrb[0].mxu0
        %v1008 = vadd.f32 0.0, %v1007
        %v1009 = vpop.f32.mrb[0].mxu0
        %v1010 = vadd.f32 0.0, %v1009
        %v1011 = vpop.f32.mrb[0].mxu0
        %v1012 = vadd.f32 0.0, %v1011
        %v1013 = vpop.f32.mrb[0].mxu0
        %v1014 = vadd.f32 0.0, %v1013
        %1015 = vmatprep.mubr.bf16.mxu0 %v592
        %1016 = vmatmul.mubr.bf16.gmra.mrb[0].mxu0 %v591
        %v1017 = vpop.f32.mrb[0].mxu0
        %v1018 = vadd.f32 0.0, %v1017
        %v1019 = vpop.f32.mrb[0].mxu0
        %v1020 = vadd.f32 0.0, %v1019
        %v1021 = vpop.f32.mrb[0].mxu0
        %v1022 = vadd.f32 0.0, %v1021
        %v1023 = vpop.f32.mrb[0].mxu0
        %v1024 = vadd.f32 0.0, %v1023
        %1025 = vmatprep.mubr.bf16.mxu0 %v594
        %1026 = vmatmul.mubr.bf16.gmra.mrb[0].mxu0 %v593
        %v1027 = vpop.f32.mrb[0].mxu0
        %v1028 = vadd.f32 0.0, %v1027
        %v1029 = vpop.f32.mrb[0].mxu0
        %v1030 = vadd.f32 0.0, %v1029
        %v1031 = vpop.f32.mrb[0].mxu0
        %v1032 = vadd.f32 0.0, %v1031
        %v1033 = vpop.f32.mrb[0].mxu0
        %v1034 = vadd.f32 0.0, %v1033
        %1035 = vmatprep.mubr.bf16.mxu0 %v596
        %1036 = vmatmul.mubr.bf16.gmra.mrb[0].mxu0 %v595
        %v1037 = vpop.f32.mrb[0].mxu0
        %v1038 = vadd.f32 0.0, %v1037
        %v1039 = vpop.f32.mrb[0].mxu0
        %v1040 = vadd.f32 0.0, %v1039
        %v1041 = vpop.f32.mrb[0].mxu0
        %v1042 = vadd.f32 0.0, %v1041
        %v1043 = vpop.f32.mrb[0].mxu0
        %v1044 = vadd.f32 0.0, %v1043
        %1045 = vdwg.mxu0
        %1046 = vmatprep.subr.bf16.mxu0 %v808
        %1047 = vmatpush1.bf16.msra.mxu0 %v807
        %1048 = vmatprep.subr.bf16.mxu0 %v812
        %1049 = vmatpush1.bf16.msra.mxu0 %v811
        %1050 = vmatprep.subr.bf16.mxu0 %v816
        %1051 = vmatpush1.bf16.msra.mxu0 %v815
        %1052 = vmatprep.subr.bf16.mxu0 %v820
        %1053 = vmatpush1.bf16.msra.mxu0 %v819
        %1054 = vmatprep.subr.bf16.mxu0 %v824
        %1055 = vmatpush1.bf16.msra.mxu0 %v823
        %1056 = vmatprep.subr.bf16.mxu0 %v828
        %1057 = vmatpush1.bf16.msra.mxu0 %v827
        %1058 = vmatprep.subr.bf16.mxu0 %v832
        %1059 = vmatpush1.bf16.msra.mxu0 %v831
        %1060 = vmatprep.subr.bf16.mxu0 %v836
        %1061 = vmatpush1.bf16.msra.mxu0 %v835
        %1062 = vmatprep.subr.bf16.mxu0 %v840
        %1063 = vmatpush1.bf16.msra.mxu0 %v839
        %1064 = vmatprep.subr.bf16.mxu0 %v844
        %1065 = vmatpush1.bf16.msra.mxu0 %v843
        %1066 = vmatprep.subr.bf16.mxu0 %v848
        %1067 = vmatpush1.bf16.msra.mxu0 %v847
        %1068 = vmatprep.subr.bf16.mxu0 %v852
        %1069 = vmatpush1.bf16.msra.mxu0 %v851
        %1070 = vmatprep.subr.bf16.mxu0 %v856
        %1071 = vmatpush1.bf16.msra.mxu0 %v855
        %1072 = vmatprep.subr.bf16.mxu0 %v860
        %1073 = vmatpush1.bf16.msra.mxu0 %v859
        %1074 = vmatprep.subr.bf16.mxu0 %v864
        %1075 = vmatpush1.bf16.msra.mxu0 %v863
        %1076 = vmatprep.subr.bf16.mxu0 %v868
        %1077 = vmatpush1.bf16.msra.mxu0 %v867
        %1078 = vmatprep.mubr.bf16.mxu0 %v582
        %1079 = vmatmul.mubr.bf16.gmra.mrb[0].mxu0 %v581
        %v1080 = vpop.f32.mrb[0].mxu0
        %v1081 = vadd.f32 0.0, %v1080
        %v1082 = vpop.f32.mrb[0].mxu0
        %v1083 = vadd.f32 0.0, %v1082
        %v1084 = vpop.f32.mrb[0].mxu0
        %v1085 = vadd.f32 0.0, %v1084
        %v1086 = vpop.f32.mrb[0].mxu0
        %v1087 = vadd.f32 0.0, %v1086
        %1088 = vmatprep.mubr.bf16.mxu0 %v584
        %1089 = vmatmul.mubr.bf16.gmra.mrb[0].mxu0 %v583
        %v1090 = vpop.f32.mrb[0].mxu0
        %v1091 = vadd.f32 0.0, %v1090
        %v1092 = vpop.f32.mrb[0].mxu0
        %v1093 = vadd.f32 0.0, %v1092
        %v1094 = vpop.f32.mrb[0].mxu0
        %v1095 = vadd.f32 0.0, %v1094
        %v1096 = vpop.f32.mrb[0].mxu0
        %v1097 = vadd.f32 0.0, %v1096
        %1098 = vmatprep.mubr.bf16.mxu0 %v586
        %1099 = vmatmul.mubr.bf16.gmra.mrb[0].mxu0 %v585
        %v1100 = vpop.f32.mrb[0].mxu0
        %v1101 = vadd.f32 0.0, %v1100
        %v1102 = vpop.f32.mrb[0].mxu0
        %v1103 = vadd.f32 0.0, %v1102
        %v1104 = vpop.f32.mrb[0].mxu0
        %v1105 = vadd.f32 0.0, %v1104
        %v1106 = vpop.f32.mrb[0].mxu0
        %v1107 = vadd.f32 0.0, %v1106
        %1108 = vmatprep.mubr.bf16.mxu0 %v588
        %1109 = vmatmul.mubr.bf16.gmra.mrb[0].mxu0 %v587
        %v1110 = vpop.f32.mrb[0].mxu0
        %v1111 = vadd.f32 0.0, %v1110
        %v1112 = vpop.f32.mrb[0].mxu0
        %v1113 = vadd.f32 0.0, %v1112
        %v1114 = vpop.f32.mrb[0].mxu0
        %v1115 = vadd.f32 0.0, %v1114
        %v1116 = vpop.f32.mrb[0].mxu0
        %v1117 = vadd.f32 0.0, %v1116
        %1118 = vmatprep.mubr.bf16.mxu0 %v590
        %1119 = vmatmul.mubr.bf16.gmra.mrb[0].mxu0 %v589
        %v1120 = vpop.f32.mrb[0].mxu0
        %v1121 = vadd.f32 0.0, %v1120
        %v1122 = vpop.f32.mrb[0].mxu0
        %v1123 = vadd.f32 0.0, %v1122
        %v1124 = vpop.f32.mrb[0].mxu0
        %v1125 = vadd.f32 0.0, %v1124
        %v1126 = vpop.f32.mrb[0].mxu0
        %v1127 = vadd.f32 0.0, %v1126
        %1128 = vmatprep.mubr.bf16.mxu0 %v592
        %1129 = vmatmul.mubr.bf16.gmra.mrb[0].mxu0 %v591
        %v1130 = vpop.f32.mrb[0].mxu0
        %v1131 = vadd.f32 0.0, %v1130
        %v1132 = vpop.f32.mrb[0].mxu0
        %v1133 = vadd.f32 0.0, %v1132
        %v1134 = vpop.f32.mrb[0].mxu0
        %v1135 = vadd.f32 0.0, %v1134
        %v1136 = vpop.f32.mrb[0].mxu0
        %v1137 = vadd.f32 0.0, %v1136
        %1138 = vmatprep.mubr.bf16.mxu0 %v594
        %1139 = vmatmul.mubr.bf16.gmra.mrb[0].mxu0 %v593
        %v1140 = vpop.f32.mrb[0].mxu0
        %v1141 = vadd.f32 0.0, %v1140
        %v1142 = vpop.f32.mrb[0].mxu0
        %v1143 = vadd.f32 0.0, %v1142
        %v1144 = vpop.f32.mrb[0].mxu0
        %v1145 = vadd.f32 0.0, %v1144
        %v1146 = vpop.f32.mrb[0].mxu0
        %v1147 = vadd.f32 0.0, %v1146
        %1148 = vmatprep.mubr.bf16.mxu0 %v596
        %1149 = vmatmul.mubr.bf16.gmra.mrb[0].mxu0 %v595
        %v1150 = vpop.f32.mrb[0].mxu0
        %v1151 = vadd.f32 0.0, %v1150
        %v1152 = vpop.f32.mrb[0].mxu0
        %v1153 = vadd.f32 0.0, %v1152
        %v1154 = vpop.f32.mrb[0].mxu0
        %v1155 = vadd.f32 0.0, %v1154
        %v1156 = vpop.f32.mrb[0].mxu0
        %v1157 = vadd.f32 0.0, %v1156
        %1158 = vdwg.mxu0
        %v1175 = vunpack.c.l.b16 %v421
        %v1176 = vunpack.c.l.b16 %v422
        %v1177 = vunpack.c.l.b16 %v423
        %v1178 = vunpack.c.l.b16 %v424
        %v1179 = vunpack.c.l.b16 %v425
        %v1180 = vunpack.c.l.b16 %v426
        %v1181 = vunpack.c.l.b16 %v427
        %v1182 = vunpack.c.l.b16 %v428
        %v1183 = vunpack.c.l.b16 %v429
        %v1184 = vunpack.c.l.b16 %v430
        %v1185 = vunpack.c.l.b16 %v431
        %v1186 = vunpack.c.l.b16 %v432
        %v1187 = vunpack.c.l.b16 %v433
        %v1188 = vunpack.c.l.b16 %v434
        %v1189 = vunpack.c.l.b16 %v435
        %v1190 = vunpack.c.l.b16 %v436
        %v1191 = vpack.c.b16 %v1176, %v1175
        %v1192 = vpack.c.b16 %v1178, %v1177
        %v1193 = vpack.c.b16 %v1180, %v1179
        %v1194 = vpack.c.b16 %v1182, %v1181
        %v1195 = vpack.c.b16 %v1184, %v1183
        %v1196 = vpack.c.b16 %v1186, %v1185
        %v1197 = vpack.c.b16 %v1188, %v1187
        %v1198 = vpack.c.b16 %v1190, %v1189
        %v1215 = vunpack.c.l.b16 %v437
        %v1216 = vunpack.c.h.b16 %v437
        %v1217 = vunpack.c.l.b16 %v438
        %v1218 = vunpack.c.h.b16 %v438
        %v1219 = vunpack.c.l.b16 %v439
        %v1220 = vunpack.c.h.b16 %v439
        %v1221 = vunpack.c.l.b16 %v440
        %v1222 = vunpack.c.h.b16 %v440
        %v1223 = vunpack.c.l.b16 %v441
        %v1224 = vunpack.c.h.b16 %v441
        %v1225 = vunpack.c.l.b16 %v442
        %v1226 = vunpack.c.h.b16 %v442
        %v1227 = vunpack.c.l.b16 %v443
        %v1228 = vunpack.c.h.b16 %v443
        %v1229 = vunpack.c.l.b16 %v444
        %v1230 = vunpack.c.h.b16 %v444
        %v1231 = vunpack.c.l.b16 %v445
        %v1232 = vunpack.c.h.b16 %v445
        %v1233 = vunpack.c.l.b16 %v446
        %v1234 = vunpack.c.h.b16 %v446
        %v1235 = vunpack.c.l.b16 %v447
        %v1236 = vunpack.c.h.b16 %v447
        %v1237 = vunpack.c.l.b16 %v448
        %v1238 = vunpack.c.h.b16 %v448
        %v1239 = vunpack.c.l.b16 %v449
        %v1240 = vunpack.c.h.b16 %v449
        %v1241 = vunpack.c.l.b16 %v450
        %v1242 = vunpack.c.h.b16 %v450
        %v1243 = vunpack.c.l.b16 %v451
        %v1244 = vunpack.c.h.b16 %v451
        %v1245 = vunpack.c.l.b16 %v452
        %v1246 = vunpack.c.h.b16 %v452
        %v1247 = vpack.c.b16 %v1219, %v1215
        %v1248 = vpack.c.b16 %v1220, %v1216
        %v1249 = vpack.c.b16 %v1221, %v1217
        %v1250 = vpack.c.b16 %v1222, %v1218
        %v1251 = vpack.c.b16 %v1227, %v1223
        %v1252 = vpack.c.b16 %v1228, %v1224
        %v1253 = vpack.c.b16 %v1229, %v1225
        %v1254 = vpack.c.b16 %v1230, %v1226
        %v1255 = vpack.c.b16 %v1235, %v1231
        %v1256 = vpack.c.b16 %v1236, %v1232
        %v1257 = vpack.c.b16 %v1237, %v1233
        %v1258 = vpack.c.b16 %v1238, %v1234
        %v1259 = vpack.c.b16 %v1243, %v1239
        %v1260 = vpack.c.b16 %v1244, %v1240
        %v1261 = vpack.c.b16 %v1245, %v1241
        %v1262 = vpack.c.b16 %v1246, %v1242
        %vm1279 = vcmask 523264
        %v1281 = vsel %vm1279, %v1191, 0
        %v1284 = vsel %vm1279, %v1192, 0
        %v1287 = vsel %vm1279, %v1193, 0
        %v1290 = vsel %vm1279, %v1194, 0
        %v1293 = vsel %vm1279, %v1195, 0
        %v1296 = vsel %vm1279, %v1196, 0
        %v1299 = vsel %vm1279, %v1197, 0
        %v1302 = vsel %vm1279, %v1198, 0
        %1304 = vmatprep.subr.bf16.mxu0 %v1248
        %1305 = vmatpush1.bf16.msra.mxu0 %v1247
        %1306 = vmatprep.subr.bf16.mxu0 %v1252
        %1307 = vmatpush1.bf16.msra.mxu0 %v1251
        %1308 = vmatprep.subr.bf16.mxu0 %v1256
        %1309 = vmatpush1.bf16.msra.mxu0 %v1255
        %1310 = vmatprep.subr.bf16.mxu0 %v1260
        %1311 = vmatpush1.bf16.msra.mxu0 %v1259
        %1312 = vmatprep.subr.bf16.mxu0 0
        %1313 = vmatpush1.bf16.msra.mxu0 0
        %1314 = vmatprep.subr.bf16.mxu0 0
        %1315 = vmatpush1.bf16.msra.mxu0 0
        %1316 = vmatprep.subr.bf16.mxu0 0
        %1317 = vmatpush1.bf16.msra.mxu0 0
        %1318 = vmatprep.subr.bf16.mxu0 0
        %1319 = vmatpush1.bf16.msra.mxu0 0
        %1320 = vmatprep.subr.bf16.mxu0 0
        %1321 = vmatpush1.bf16.msra.mxu0 0
        %1322 = vmatprep.subr.bf16.mxu0 0
        %1323 = vmatpush1.bf16.msra.mxu0 0
        %1324 = vmatprep.subr.bf16.mxu0 0
        %1325 = vmatpush1.bf16.msra.mxu0 0
        %1326 = vmatprep.subr.bf16.mxu0 0
        %1327 = vmatpush1.bf16.msra.mxu0 0
        %1328 = vmatprep.subr.bf16.mxu0 0
        %1329 = vmatpush1.bf16.msra.mxu0 0
        %1330 = vmatprep.subr.bf16.mxu0 0
        %1331 = vmatpush1.bf16.msra.mxu0 0
        %1332 = vmatprep.subr.bf16.mxu0 0
        %1333 = vmatpush1.bf16.msra.mxu0 0
        %1334 = vmatprep.subr.bf16.mxu0 0
        %1335 = vmatpush1.bf16.msra.mxu0 0
        %1336 = vmatprep.mubr.bf16.mxu0 0
        %1337 = vmatmul.mubr.bf16.gmra.mrb[0].mxu0 %v1281
        %v1338 = vpop.f32.mrb[0].mxu0
        %v1339 = vadd.f32 %v968, %v1338
        %v1340 = vpop.f32.mrb[0].mxu0
        %v1341 = vadd.f32 %v970, %v1340
        %v1342 = vpop.f32.mrb[0].mxu0
        %v1343 = vadd.f32 %v972, %v1342
        %v1344 = vpop.f32.mrb[0].mxu0
        %v1345 = vadd.f32 %v974, %v1344
        %1346 = vmatprep.mubr.bf16.mxu0 0
        %1347 = vmatmul.mubr.bf16.gmra.mrb[0].mxu0 %v1284
        %v1348 = vpop.f32.mrb[0].mxu0
        %v1349 = vadd.f32 %v978, %v1348
        %v1350 = vpop.f32.mrb[0].mxu0
        %v1351 = vadd.f32 %v980, %v1350
        %v1352 = vpop.f32.mrb[0].mxu0
        %v1353 = vadd.f32 %v982, %v1352
        %v1354 = vpop.f32.mrb[0].mxu0
        %v1355 = vadd.f32 %v984, %v1354
        %1356 = vmatprep.mubr.bf16.mxu0 0
        %1357 = vmatmul.mubr.bf16.gmra.mrb[0].mxu0 %v1287
        %v1358 = vpop.f32.mrb[0].mxu0
        %v1359 = vadd.f32 %v988, %v1358
        %v1360 = vpop.f32.mrb[0].mxu0
        %v1361 = vadd.f32 %v990, %v1360
        %v1362 = vpop.f32.mrb[0].mxu0
        %v1363 = vadd.f32 %v992, %v1362
        %v1364 = vpop.f32.mrb[0].mxu0
        %v1365 = vadd.f32 %v994, %v1364
        %1366 = vmatprep.mubr.bf16.mxu0 0
        %1367 = vmatmul.mubr.bf16.gmra.mrb[0].mxu0 %v1290
        %v1368 = vpop.f32.mrb[0].mxu0
        %v1369 = vadd.f32 %v998, %v1368
        %v1370 = vpop.f32.mrb[0].mxu0
        %v1371 = vadd.f32 %v1000, %v1370
        %v1372 = vpop.f32.mrb[0].mxu0
        %v1373 = vadd.f32 %v1002, %v1372
        %v1374 = vpop.f32.mrb[0].mxu0
        %v1375 = vadd.f32 %v1004, %v1374
        %1376 = vmatprep.mubr.bf16.mxu0 0
        %1377 = vmatmul.mubr.bf16.gmra.mrb[0].mxu0 %v1293
        %v1378 = vpop.f32.mrb[0].mxu0
        %v1379 = vadd.f32 %v1008, %v1378
        %v1380 = vpop.f32.mrb[0].mxu0
        %v1381 = vadd.f32 %v1010, %v1380
        %v1382 = vpop.f32.mrb[0].mxu0
        %v1383 = vadd.f32 %v1012, %v1382
        %v1384 = vpop.f32.mrb[0].mxu0
        %v1385 = vadd.f32 %v1014, %v1384
        %1386 = vmatprep.mubr.bf16.mxu0 0
        %1387 = vmatmul.mubr.bf16.gmra.mrb[0].mxu0 %v1296
        %v1388 = vpop.f32.mrb[0].mxu0
        %v1389 = vadd.f32 %v1018, %v1388
        %v1390 = vpop.f32.mrb[0].mxu0
        %v1391 = vadd.f32 %v1020, %v1390
        %v1392 = vpop.f32.mrb[0].mxu0
        %v1393 = vadd.f32 %v1022, %v1392
        %v1394 = vpop.f32.mrb[0].mxu0
        %v1395 = vadd.f32 %v1024, %v1394
        %1396 = vmatprep.mubr.bf16.mxu0 0
        %1397 = vmatmul.mubr.bf16.gmra.mrb[0].mxu0 %v1299
        %v1398 = vpop.f32.mrb[0].mxu0
        %v1399 = vadd.f32 %v1028, %v1398
        %v1400 = vpop.f32.mrb[0].mxu0
        %v1401 = vadd.f32 %v1030, %v1400
        %v1402 = vpop.f32.mrb[0].mxu0
        %v1403 = vadd.f32 %v1032, %v1402
        %v1404 = vpop.f32.mrb[0].mxu0
        %v1405 = vadd.f32 %v1034, %v1404
        %1406 = vmatprep.mubr.bf16.mxu0 0
        %1407 = vmatmul.mubr.bf16.gmra.mrb[0].mxu0 %v1302
        %v1408 = vpop.f32.mrb[0].mxu0
        %v1409 = vadd.f32 %v1038, %v1408
        %v1410 = vpop.f32.mrb[0].mxu0
        %v1411 = vadd.f32 %v1040, %v1410
        %v1412 = vpop.f32.mrb[0].mxu0
        %v1413 = vadd.f32 %v1042, %v1412
        %v1414 = vpop.f32.mrb[0].mxu0
        %v1415 = vadd.f32 %v1044, %v1414
        %1416 = vdwg.mxu0
        %1417 = vmatprep.subr.bf16.mxu0 %v1250
        %1418 = vmatpush1.bf16.msra.mxu0 %v1249
        %1419 = vmatprep.subr.bf16.mxu0 %v1254
        %1420 = vmatpush1.bf16.msra.mxu0 %v1253
        %1421 = vmatprep.subr.bf16.mxu0 %v1258
        %1422 = vmatpush1.bf16.msra.mxu0 %v1257
        %1423 = vmatprep.subr.bf16.mxu0 %v1262
        %1424 = vmatpush1.bf16.msra.mxu0 %v1261
        %1425 = vmatprep.subr.bf16.mxu0 0
        %1426 = vmatpush1.bf16.msra.mxu0 0
        %1427 = vmatprep.subr.bf16.mxu0 0
        %1428 = vmatpush1.bf16.msra.mxu0 0
        %1429 = vmatprep.subr.bf16.mxu0 0
        %1430 = vmatpush1.bf16.msra.mxu0 0
        %1431 = vmatprep.subr.bf16.mxu0 0
        %1432 = vmatpush1.bf16.msra.mxu0 0
        %1433 = vmatprep.subr.bf16.mxu0 0
        %1434 = vmatpush1.bf16.msra.mxu0 0
        %1435 = vmatprep.subr.bf16.mxu0 0
        %1436 = vmatpush1.bf16.msra.mxu0 0
        %1437 = vmatprep.subr.bf16.mxu0 0
        %1438 = vmatpush1.bf16.msra.mxu0 0
        %1439 = vmatprep.subr.bf16.mxu0 0
        %1440 = vmatpush1.bf16.msra.mxu0 0
        %1441 = vmatprep.subr.bf16.mxu0 0
        %1442 = vmatpush1.bf16.msra.mxu0 0
        %1443 = vmatprep.subr.bf16.mxu0 0
        %1444 = vmatpush1.bf16.msra.mxu0 0
        %1445 = vmatprep.subr.bf16.mxu0 0
        %1446 = vmatpush1.bf16.msra.mxu0 0
        %1447 = vmatprep.subr.bf16.mxu0 0
        %1448 = vmatpush1.bf16.msra.mxu0 0
        %1449 = vmatprep.mubr.bf16.mxu0 0
        %1450 = vmatmul.mubr.bf16.gmra.mrb[0].mxu0 %v1281
        %v1451 = vpop.f32.mrb[0].mxu0
        %v1452 = vadd.f32 %v1081, %v1451
        %v1453 = vpop.f32.mrb[0].mxu0
        %v1454 = vadd.f32 %v1083, %v1453
        %v1455 = vpop.f32.mrb[0].mxu0
        %v1456 = vadd.f32 %v1085, %v1455
        %v1457 = vpop.f32.mrb[0].mxu0
        %v1458 = vadd.f32 %v1087, %v1457
        %1459 = vmatprep.mubr.bf16.mxu0 0
        %1460 = vmatmul.mubr.bf16.gmra.mrb[0].mxu0 %v1284
        %v1461 = vpop.f32.mrb[0].mxu0
        %v1462 = vadd.f32 %v1091, %v1461
        %v1463 = vpop.f32.mrb[0].mxu0
        %v1464 = vadd.f32 %v1093, %v1463
        %v1465 = vpop.f32.mrb[0].mxu0
        %v1466 = vadd.f32 %v1095, %v1465
        %v1467 = vpop.f32.mrb[0].mxu0
        %v1468 = vadd.f32 %v1097, %v1467
        %1469 = vmatprep.mubr.bf16.mxu0 0
        %1470 = vmatmul.mubr.bf16.gmra.mrb[0].mxu0 %v1287
        %v1471 = vpop.f32.mrb[0].mxu0
        %v1472 = vadd.f32 %v1101, %v1471
        %v1473 = vpop.f32.mrb[0].mxu0
        %v1474 = vadd.f32 %v1103, %v1473
        %v1475 = vpop.f32.mrb[0].mxu0
        %v1476 = vadd.f32 %v1105, %v1475
        %v1477 = vpop.f32.mrb[0].mxu0
        %v1478 = vadd.f32 %v1107, %v1477
        %1479 = vmatprep.mubr.bf16.mxu0 0
        %1480 = vmatmul.mubr.bf16.gmra.mrb[0].mxu0 %v1290
        %v1481 = vpop.f32.mrb[0].mxu0
        %v1482 = vadd.f32 %v1111, %v1481
        %v1483 = vpop.f32.mrb[0].mxu0
        %v1484 = vadd.f32 %v1113, %v1483
        %v1485 = vpop.f32.mrb[0].mxu0
        %v1486 = vadd.f32 %v1115, %v1485
        %v1487 = vpop.f32.mrb[0].mxu0
        %v1488 = vadd.f32 %v1117, %v1487
        %1489 = vmatprep.mubr.bf16.mxu0 0
        %1490 = vmatmul.mubr.bf16.gmra.mrb[0].mxu0 %v1293
        %v1491 = vpop.f32.mrb[0].mxu0
        %v1492 = vadd.f32 %v1121, %v1491
        %v1493 = vpop.f32.mrb[0].mxu0
        %v1494 = vadd.f32 %v1123, %v1493
        %v1495 = vpop.f32.mrb[0].mxu0
        %v1496 = vadd.f32 %v1125, %v1495
        %v1497 = vpop.f32.mrb[0].mxu0
        %v1498 = vadd.f32 %v1127, %v1497
        %1499 = vmatprep.mubr.bf16.mxu0 0
        %1500 = vmatmul.mubr.bf16.gmra.mrb[0].mxu0 %v1296
        %v1501 = vpop.f32.mrb[0].mxu0
        %v1502 = vadd.f32 %v1131, %v1501
        %v1503 = vpop.f32.mrb[0].mxu0
        %v1504 = vadd.f32 %v1133, %v1503
        %v1505 = vpop.f32.mrb[0].mxu0
        %v1506 = vadd.f32 %v1135, %v1505
        %v1507 = vpop.f32.mrb[0].mxu0
        %v1508 = vadd.f32 %v1137, %v1507
        %1509 = vmatprep.mubr.bf16.mxu0 0
        %1510 = vmatmul.mubr.bf16.gmra.mrb[0].mxu0 %v1299
        %v1511 = vpop.f32.mrb[0].mxu0
        %v1512 = vadd.f32 %v1141, %v1511
        %v1513 = vpop.f32.mrb[0].mxu0
        %v1514 = vadd.f32 %v1143, %v1513
        %v1515 = vpop.f32.mrb[0].mxu0
        %v1516 = vadd.f32 %v1145, %v1515
        %v1517 = vpop.f32.mrb[0].mxu0
        %v1518 = vadd.f32 %v1147, %v1517
        %1519 = vmatprep.mubr.bf16.mxu0 0
        %1520 = vmatmul.mubr.bf16.gmra.mrb[0].mxu0 %v1302
        %v1521 = vpop.f32.mrb[0].mxu0
        %v1522 = vadd.f32 %v1151, %v1521
        %v1523 = vpop.f32.mrb[0].mxu0
        %v1524 = vadd.f32 %v1153, %v1523
        %v1525 = vpop.f32.mrb[0].mxu0
        %v1526 = vadd.f32 %v1155, %v1525
        %v1527 = vpop.f32.mrb[0].mxu0
        %v1528 = vadd.f32 %v1157, %v1527
        %1529 = vdwg.mxu0
        %v1530 = vld [vmem:[%s4] sm:$0xf]
        %v1532 = vlaneseq
        %v1533 = vshrl.u32 %v1532, 7
        %v1534 = vsub.s32 0, %v1533
        %v1535 = vrot.slane %v1530, %v1534
        %v1536 = vlaneseq
        %v1537 = vshrl.u32 %v1536, 7
        %v1538 = vsub.s32 1, %v1537
        %v1539 = vrot.slane %v1530, %v1538
        %v1540 = vlaneseq
        %v1541 = vshrl.u32 %v1540, 7
        %v1542 = vsub.s32 2, %v1541
        %v1543 = vrot.slane %v1530, %v1542
        %v1544 = vlaneseq
        %v1545 = vshrl.u32 %v1544, 7
        %v1546 = vsub.s32 3, %v1545
        %v1547 = vrot.slane %v1530, %v1546
        %v1552 = vadd.f32 %v1339, %v1535
        %v1553 = vadd.f32 %v1341, %v1539
        %v1554 = vadd.f32 %v1452, %v1543
        %v1555 = vadd.f32 %v1454, %v1547
        %v1556 = vadd.f32 %v1343, %v1535
        %v1557 = vadd.f32 %v1345, %v1539
        %v1558 = vadd.f32 %v1456, %v1543
        %v1559 = vadd.f32 %v1458, %v1547
        %v1560 = vadd.f32 %v1349, %v1535
        %v1561 = vadd.f32 %v1351, %v1539
        %v1562 = vadd.f32 %v1462, %v1543
        %v1563 = vadd.f32 %v1464, %v1547
        %v1564 = vadd.f32 %v1353, %v1535
        %v1565 = vadd.f32 %v1355, %v1539
        %v1566 = vadd.f32 %v1466, %v1543
        %v1567 = vadd.f32 %v1468, %v1547
        %v1568 = vadd.f32 %v1359, %v1535
        %v1569 = vadd.f32 %v1361, %v1539
        %v1570 = vadd.f32 %v1472, %v1543
        %v1571 = vadd.f32 %v1474, %v1547
        %v1572 = vadd.f32 %v1363, %v1535
        %v1573 = vadd.f32 %v1365, %v1539
        %v1574 = vadd.f32 %v1476, %v1543
        %v1575 = vadd.f32 %v1478, %v1547
        %v1576 = vadd.f32 %v1369, %v1535
        %v1577 = vadd.f32 %v1371, %v1539
        %v1578 = vadd.f32 %v1482, %v1543
        %v1579 = vadd.f32 %v1484, %v1547
        %v1580 = vadd.f32 %v1373, %v1535
        %v1581 = vadd.f32 %v1375, %v1539
        %v1582 = vadd.f32 %v1486, %v1543
        %v1583 = vadd.f32 %v1488, %v1547
        %v1584 = vadd.f32 %v1379, %v1535
        %v1585 = vadd.f32 %v1381, %v1539
        %v1586 = vadd.f32 %v1492, %v1543
        %v1587 = vadd.f32 %v1494, %v1547
        %v1588 = vadd.f32 %v1383, %v1535
        %v1589 = vadd.f32 %v1385, %v1539
        %v1590 = vadd.f32 %v1496, %v1543
        %v1591 = vadd.f32 %v1498, %v1547
        %v1592 = vadd.f32 %v1389, %v1535
        %v1593 = vadd.f32 %v1391, %v1539
        %v1594 = vadd.f32 %v1502, %v1543
        %v1595 = vadd.f32 %v1504, %v1547
        %v1596 = vadd.f32 %v1393, %v1535
        %v1597 = vadd.f32 %v1395, %v1539
        %v1598 = vadd.f32 %v1506, %v1543
        %v1599 = vadd.f32 %v1508, %v1547
        %v1600 = vadd.f32 %v1399, %v1535
        %v1601 = vadd.f32 %v1401, %v1539
        %v1602 = vadd.f32 %v1512, %v1543
        %v1603 = vadd.f32 %v1514, %v1547
        %v1604 = vadd.f32 %v1403, %v1535
        %v1605 = vadd.f32 %v1405, %v1539
        %v1606 = vadd.f32 %v1516, %v1543
        %v1607 = vadd.f32 %v1518, %v1547
        %v1608 = vadd.f32 %v1409, %v1535
        %v1609 = vadd.f32 %v1411, %v1539
        %v1610 = vadd.f32 %v1522, %v1543
        %v1611 = vadd.f32 %v1524, %v1547
        %v1612 = vadd.f32 %v1413, %v1535
        %v1613 = vadd.f32 %v1415, %v1539
        %v1614 = vadd.f32 %v1526, %v1543
        %v1615 = vadd.f32 %v1528, %v1547
        %v1616 = vmax.f32 %v1552, 0.0
        %v1617 = vmax.f32 %v1553, 0.0
        %v1618 = vmax.f32 %v1554, 0.0
        %v1619 = vmax.f32 %v1555, 0.0
        %v1620 = vmax.f32 %v1556, 0.0
        %v1621 = vmax.f32 %v1557, 0.0
        %v1622 = vmax.f32 %v1558, 0.0
        %v1623 = vmax.f32 %v1559, 0.0
        %v1624 = vmax.f32 %v1560, 0.0
        %v1625 = vmax.f32 %v1561, 0.0
        %v1626 = vmax.f32 %v1562, 0.0
        %v1627 = vmax.f32 %v1563, 0.0
        %v1628 = vmax.f32 %v1564, 0.0
        %v1629 = vmax.f32 %v1565, 0.0
        %v1630 = vmax.f32 %v1566, 0.0
        %v1631 = vmax.f32 %v1567, 0.0
        %v1632 = vmax.f32 %v1568, 0.0
        %v1633 = vmax.f32 %v1569, 0.0
        %v1634 = vmax.f32 %v1570, 0.0
        %v1635 = vmax.f32 %v1571, 0.0
        %v1636 = vmax.f32 %v1572, 0.0
        %v1637 = vmax.f32 %v1573, 0.0
        %v1638 = vmax.f32 %v1574, 0.0
        %v1639 = vmax.f32 %v1575, 0.0
        %v1640 = vmax.f32 %v1576, 0.0
        %v1641 = vmax.f32 %v1577, 0.0
        %v1642 = vmax.f32 %v1578, 0.0
        %v1643 = vmax.f32 %v1579, 0.0
        %v1644 = vmax.f32 %v1580, 0.0
        %v1645 = vmax.f32 %v1581, 0.0
        %v1646 = vmax.f32 %v1582, 0.0
        %v1647 = vmax.f32 %v1583, 0.0
        %v1648 = vmax.f32 %v1584, 0.0
        %v1649 = vmax.f32 %v1585, 0.0
        %v1650 = vmax.f32 %v1586, 0.0
        %v1651 = vmax.f32 %v1587, 0.0
        %v1652 = vmax.f32 %v1588, 0.0
        %v1653 = vmax.f32 %v1589, 0.0
        %v1654 = vmax.f32 %v1590, 0.0
        %v1655 = vmax.f32 %v1591, 0.0
        %v1656 = vmax.f32 %v1592, 0.0
        %v1657 = vmax.f32 %v1593, 0.0
        %v1658 = vmax.f32 %v1594, 0.0
        %v1659 = vmax.f32 %v1595, 0.0
        %v1660 = vmax.f32 %v1596, 0.0
        %v1661 = vmax.f32 %v1597, 0.0
        %v1662 = vmax.f32 %v1598, 0.0
        %v1663 = vmax.f32 %v1599, 0.0
        %v1664 = vmax.f32 %v1600, 0.0
        %v1665 = vmax.f32 %v1601, 0.0
        %v1666 = vmax.f32 %v1602, 0.0
        %v1667 = vmax.f32 %v1603, 0.0
        %v1668 = vmax.f32 %v1604, 0.0
        %v1669 = vmax.f32 %v1605, 0.0
        %v1670 = vmax.f32 %v1606, 0.0
        %v1671 = vmax.f32 %v1607, 0.0
        %v1672 = vmax.f32 %v1608, 0.0
        %v1673 = vmax.f32 %v1609, 0.0
        %v1674 = vmax.f32 %v1610, 0.0
        %v1675 = vmax.f32 %v1611, 0.0
        %v1676 = vmax.f32 %v1612, 0.0
        %v1677 = vmax.f32 %v1613, 0.0
        %v1678 = vmax.f32 %v1614, 0.0
        %v1679 = vmax.f32 %v1615, 0.0
        %v1680 = vpack.c.bf16 %v1620, %v1616
        %v1681 = vpack.c.bf16 %v1621, %v1617
        %v1682 = vpack.c.bf16 %v1622, %v1618
        %v1683 = vpack.c.bf16 %v1623, %v1619
        %v1684 = vpack.c.bf16 %v1628, %v1624
        %v1685 = vpack.c.bf16 %v1629, %v1625
        %v1686 = vpack.c.bf16 %v1630, %v1626
        %v1687 = vpack.c.bf16 %v1631, %v1627
        %v1688 = vpack.c.bf16 %v1636, %v1632
        %v1689 = vpack.c.bf16 %v1637, %v1633
        %v1690 = vpack.c.bf16 %v1638, %v1634
        %v1691 = vpack.c.bf16 %v1639, %v1635
        %v1692 = vpack.c.bf16 %v1644, %v1640
        %v1693 = vpack.c.bf16 %v1645, %v1641
        %v1694 = vpack.c.bf16 %v1646, %v1642
        %v1695 = vpack.c.bf16 %v1647, %v1643
        %v1696 = vpack.c.bf16 %v1652, %v1648
        %v1697 = vpack.c.bf16 %v1653, %v1649
        %v1698 = vpack.c.bf16 %v1654, %v1650
        %v1699 = vpack.c.bf16 %v1655, %v1651
        %v1700 = vpack.c.bf16 %v1660, %v1656
        %v1701 = vpack.c.bf16 %v1661, %v1657
        %v1702 = vpack.c.bf16 %v1662, %v1658
        %v1703 = vpack.c.bf16 %v1663, %v1659
        %v1704 = vpack.c.bf16 %v1668, %v1664
        %v1705 = vpack.c.bf16 %v1669, %v1665
        %v1706 = vpack.c.bf16 %v1670, %v1666
        %v1707 = vpack.c.bf16 %v1671, %v1667
        %v1708 = vpack.c.bf16 %v1676, %v1672
        %v1709 = vpack.c.bf16 %v1677, %v1673
        %v1710 = vpack.c.bf16 %v1678, %v1674
        %v1711 = vpack.c.bf16 %v1679, %v1675
        %v1712 = vld [vmem:[#allocation7] sm:$0xff]
        %v1713 = vld [vmem:[#allocation7 + $0x8] sm:$0xff]
        %v1714 = vld [vmem:[#allocation7 + $0x10] sm:$0xff]
        %v1715 = vld [vmem:[#allocation7 + $0x18] sm:$0xff]
        %v1716 = vld [vmem:[#allocation7 + $0x20] sm:$0xff]
        %v1717 = vld [vmem:[#allocation7 + $0x28] sm:$0xff]
        %v1718 = vld [vmem:[#allocation7 + $0x30] sm:$0xff]
        %v1719 = vld [vmem:[#allocation7 + $0x38] sm:$0xff]
        %v1720 = vld [vmem:[#allocation7 + $0x40] sm:$0xff]
        %v1721 = vld [vmem:[#allocation7 + $0x48] sm:$0xff]
        %v1722 = vld [vmem:[#allocation7 + $0x50] sm:$0xff]
        %v1723 = vld [vmem:[#allocation7 + $0x58] sm:$0xff]
        %v1724 = vld [vmem:[#allocation7 + $0x60] sm:$0xff]
        %v1725 = vld [vmem:[#allocation7 + $0x68] sm:$0xff]
        %v1726 = vld [vmem:[#allocation7 + $0x70] sm:$0xff]
        %v1727 = vld [vmem:[#allocation7 + $0x78] sm:$0xff]
        %v1728 = vld [vmem:[#allocation7 + $0x80] sm:$0xff]
        %v1729 = vld [vmem:[#allocation7 + $0x88] sm:$0xff]
        %v1730 = vld [vmem:[#allocation7 + $0x90] sm:$0xff]
        %v1731 = vld [vmem:[#allocation7 + $0x98] sm:$0xff]
        %v1732 = vld [vmem:[#allocation7 + $0xa0] sm:$0xff]
        %v1733 = vld [vmem:[#allocation7 + $0xa8] sm:$0xff]
        %v1734 = vld [vmem:[#allocation7 + $0xb0] sm:$0xff]
        %v1735 = vld [vmem:[#allocation7 + $0xb8] sm:$0xff]
        %v1736 = vld [vmem:[#allocation7 + $0xc0] sm:$0xff]
        %v1737 = vld [vmem:[#allocation7 + $0xc8] sm:$0xff]
        %v1738 = vld [vmem:[#allocation7 + $0xd0] sm:$0xff]
        %v1739 = vld [vmem:[#allocation7 + $0xd8] sm:$0xff]
        %v1740 = vld [vmem:[#allocation7 + $0xe0] sm:$0xff]
        %v1741 = vld [vmem:[#allocation7 + $0xe8] sm:$0xff]
        %v1742 = vld [vmem:[#allocation7 + $0xf0] sm:$0xff]
        %v1743 = vld [vmem:[#allocation7 + $0xf8] sm:$0xff]
        %v1744 = vld [vmem:[#allocation7 + $0x100] sm:$0xff]
        %v1745 = vld [vmem:[#allocation7 + $0x108] sm:$0xff]
        %v1746 = vld [vmem:[#allocation7 + $0x110] sm:$0xff]
        %v1747 = vld [vmem:[#allocation7 + $0x118] sm:$0xff]
        %v1748 = vld [vmem:[#allocation7 + $0x120] sm:$0xff]
        %v1749 = vld [vmem:[#allocation7 + $0x128] sm:$0xff]
        %v1750 = vld [vmem:[#allocation7 + $0x130] sm:$0xff]
        %v1751 = vld [vmem:[#allocation7 + $0x138] sm:$0xff]
        %v1752 = vld [vmem:[#allocation7 + $0x140] sm:$0xff]
        %v1753 = vld [vmem:[#allocation7 + $0x148] sm:$0xff]
        %v1754 = vld [vmem:[#allocation7 + $0x150] sm:$0xff]
        %v1755 = vld [vmem:[#allocation7 + $0x158] sm:$0xff]
        %v1756 = vld [vmem:[#allocation7 + $0x160] sm:$0xff]
        %v1757 = vld [vmem:[#allocation7 + $0x168] sm:$0xff]
        %v1758 = vld [vmem:[#allocation7 + $0x170] sm:$0xff]
        %v1759 = vld [vmem:[#allocation7 + $0x178] sm:$0xff]
        %v1760 = vld [vmem:[#allocation7 + $0x180] sm:$0xff]
        %v1761 = vld [vmem:[#allocation7 + $0x188] sm:$0xff]
        %v1762 = vld [vmem:[#allocation7 + $0x190] sm:$0xff]
        %v1763 = vld [vmem:[#allocation7 + $0x198] sm:$0xff]
        %v1764 = vld [vmem:[#allocation7 + $0x1a0] sm:$0xff]
        %v1765 = vld [vmem:[#allocation7 + $0x1a8] sm:$0xff]
        %v1766 = vld [vmem:[#allocation7 + $0x1b0] sm:$0xff]
        %v1767 = vld [vmem:[#allocation7 + $0x1b8] sm:$0xff]
        %v1768 = vld [vmem:[#allocation7 + $0x1c0] sm:$0xff]
        %v1769 = vld [vmem:[#allocation7 + $0x1c8] sm:$0xff]
        %v1770 = vld [vmem:[#allocation7 + $0x1d0] sm:$0xff]
        %v1771 = vld [vmem:[#allocation7 + $0x1d8] sm:$0xff]
        %v1772 = vld [vmem:[#allocation7 + $0x1e0] sm:$0xff]
        %v1773 = vld [vmem:[#allocation7 + $0x1e8] sm:$0xff]
        %v1774 = vld [vmem:[#allocation7 + $0x1f0] sm:$0xff]
        %v1775 = vld [vmem:[#allocation7 + $0x1f8] sm:$0xff]
        %v1776 = vld [vmem:[%s6] sm:$0x3]
        %v1778 = vlaneseq
        %v1779 = vshrl.u32 %v1778, 7
        %v1780 = vsub.s32 0, %v1779
        %v1781 = vrot.slane %v1776, %v1780
        %v1782 = vlaneseq
        %v1783 = vshrl.u32 %v1782, 7
        %v1784 = vsub.s32 1, %v1783
        %v1785 = vrot.slane %v1776, %v1784
        %v1852 = vunpack.c.l.b16 %v1712
        %v1853 = vunpack.c.h.b16 %v1712
        %v1854 = vunpack.c.l.b16 %v1713
        %v1855 = vunpack.c.h.b16 %v1713
        %v1856 = vunpack.c.l.b16 %v1714
        %v1857 = vunpack.c.h.b16 %v1714
        %v1858 = vunpack.c.l.b16 %v1715
        %v1859 = vunpack.c.h.b16 %v1715
        %v1860 = vunpack.c.l.b16 %v1716
        %v1861 = vunpack.c.h.b16 %v1716
        %v1862 = vunpack.c.l.b16 %v1717
        %v1863 = vunpack.c.h.b16 %v1717
        %v1864 = vunpack.c.l.b16 %v1718
        %v1865 = vunpack.c.h.b16 %v1718
        %v1866 = vunpack.c.l.b16 %v1719
        %v1867 = vunpack.c.h.b16 %v1719
        %v1868 = vunpack.c.l.b16 %v1720
        %v1869 = vunpack.c.h.b16 %v1720
        %v1870 = vunpack.c.l.b16 %v1721
        %v1871 = vunpack.c.h.b16 %v1721
        %v1872 = vunpack.c.l.b16 %v1722
        %v1873 = vunpack.c.h.b16 %v1722
        %v1874 = vunpack.c.l.b16 %v1723
        %v1875 = vunpack.c.h.b16 %v1723
        %v1876 = vunpack.c.l.b16 %v1724
        %v1877 = vunpack.c.h.b16 %v1724
        %v1878 = vunpack.c.l.b16 %v1725
        %v1879 = vunpack.c.h.b16 %v1725
        %v1880 = vunpack.c.l.b16 %v1726
        %v1881 = vunpack.c.h.b16 %v1726
        %v1882 = vunpack.c.l.b16 %v1727
        %v1883 = vunpack.c.h.b16 %v1727
        %v1884 = vunpack.c.l.b16 %v1728
        %v1885 = vunpack.c.h.b16 %v1728
        %v1886 = vunpack.c.l.b16 %v1729
        %v1887 = vunpack.c.h.b16 %v1729
        %v1888 = vunpack.c.l.b16 %v1730
        %v1889 = vunpack.c.h.b16 %v1730
        %v1890 = vunpack.c.l.b16 %v1731
        %v1891 = vunpack.c.h.b16 %v1731
        %v1892 = vunpack.c.l.b16 %v1732
        %v1893 = vunpack.c.h.b16 %v1732
        %v1894 = vunpack.c.l.b16 %v1733
        %v1895 = vunpack.c.h.b16 %v1733
        %v1896 = vunpack.c.l.b16 %v1734
        %v1897 = vunpack.c.h.b16 %v1734
        %v1898 = vunpack.c.l.b16 %v1735
        %v1899 = vunpack.c.h.b16 %v1735
        %v1900 = vunpack.c.l.b16 %v1736
        %v1901 = vunpack.c.h.b16 %v1736
        %v1902 = vunpack.c.l.b16 %v1737
        %v1903 = vunpack.c.h.b16 %v1737
        %v1904 = vunpack.c.l.b16 %v1738
        %v1905 = vunpack.c.h.b16 %v1738
        %v1906 = vunpack.c.l.b16 %v1739
        %v1907 = vunpack.c.h.b16 %v1739
        %v1908 = vunpack.c.l.b16 %v1740
        %v1909 = vunpack.c.h.b16 %v1740
        %v1910 = vunpack.c.l.b16 %v1741
        %v1911 = vunpack.c.h.b16 %v1741
        %v1912 = vunpack.c.l.b16 %v1742
        %v1913 = vunpack.c.h.b16 %v1742
        %v1914 = vunpack.c.l.b16 %v1743
        %v1915 = vunpack.c.h.b16 %v1743
        %v1916 = vunpack.c.l.b16 %v1744
        %v1917 = vunpack.c.h.b16 %v1744
        %v1918 = vunpack.c.l.b16 %v1745
        %v1919 = vunpack.c.h.b16 %v1745
        %v1920 = vunpack.c.l.b16 %v1746
        %v1921 = vunpack.c.h.b16 %v1746
        %v1922 = vunpack.c.l.b16 %v1747
        %v1923 = vunpack.c.h.b16 %v1747
        %v1924 = vunpack.c.l.b16 %v1748
        %v1925 = vunpack.c.h.b16 %v1748
        %v1926 = vunpack.c.l.b16 %v1749
        %v1927 = vunpack.c.h.b16 %v1749
        %v1928 = vunpack.c.l.b16 %v1750
        %v1929 = vunpack.c.h.b16 %v1750
        %v1930 = vunpack.c.l.b16 %v1751
        %v1931 = vunpack.c.h.b16 %v1751
        %v1932 = vunpack.c.l.b16 %v1752
        %v1933 = vunpack.c.h.b16 %v1752
        %v1934 = vunpack.c.l.b16 %v1753
        %v1935 = vunpack.c.h.b16 %v1753
        %v1936 = vunpack.c.l.b16 %v1754
        %v1937 = vunpack.c.h.b16 %v1754
        %v1938 = vunpack.c.l.b16 %v1755
        %v1939 = vunpack.c.h.b16 %v1755
        %v1940 = vunpack.c.l.b16 %v1756
        %v1941 = vunpack.c.h.b16 %v1756
        %v1942 = vunpack.c.l.b16 %v1757
        %v1943 = vunpack.c.h.b16 %v1757
        %v1944 = vunpack.c.l.b16 %v1758
        %v1945 = vunpack.c.h.b16 %v1758
        %v1946 = vunpack.c.l.b16 %v1759
        %v1947 = vunpack.c.h.b16 %v1759
        %v1948 = vunpack.c.l.b16 %v1760
        %v1949 = vunpack.c.h.b16 %v1760
        %v1950 = vunpack.c.l.b16 %v1761
        %v1951 = vunpack.c.h.b16 %v1761
        %v1952 = vunpack.c.l.b16 %v1762
        %v1953 = vunpack.c.h.b16 %v1762
        %v1954 = vunpack.c.l.b16 %v1763
        %v1955 = vunpack.c.h.b16 %v1763
        %v1956 = vunpack.c.l.b16 %v1764
        %v1957 = vunpack.c.h.b16 %v1764
        %v1958 = vunpack.c.l.b16 %v1765
        %v1959 = vunpack.c.h.b16 %v1765
        %v1960 = vunpack.c.l.b16 %v1766
        %v1961 = vunpack.c.h.b16 %v1766
        %v1962 = vunpack.c.l.b16 %v1767
        %v1963 = vunpack.c.h.b16 %v1767
        %v1964 = vunpack.c.l.b16 %v1768
        %v1965 = vunpack.c.h.b16 %v1768
        %v1966 = vunpack.c.l.b16 %v1769
        %v1967 = vunpack.c.h.b16 %v1769
        %v1968 = vunpack.c.l.b16 %v1770
        %v1969 = vunpack.c.h.b16 %v1770
        %v1970 = vunpack.c.l.b16 %v1771
        %v1971 = vunpack.c.h.b16 %v1771
        %v1972 = vunpack.c.l.b16 %v1772
        %v1973 = vunpack.c.h.b16 %v1772
        %v1974 = vunpack.c.l.b16 %v1773
        %v1975 = vunpack.c.h.b16 %v1773
        %v1976 = vunpack.c.l.b16 %v1774
        %v1977 = vunpack.c.h.b16 %v1774
        %v1978 = vunpack.c.l.b16 %v1775
        %v1979 = vunpack.c.h.b16 %v1775
        %v1980 = vpack.c.b16 %v1854, %v1852
        %v1981 = vpack.c.b16 %v1855, %v1853
        %v1982 = vpack.c.b16 %v1858, %v1856
        %v1983 = vpack.c.b16 %v1859, %v1857
        %v1984 = vpack.c.b16 %v1862, %v1860
        %v1985 = vpack.c.b16 %v1863, %v1861
        %v1986 = vpack.c.b16 %v1866, %v1864
        %v1987 = vpack.c.b16 %v1867, %v1865
        %v1988 = vpack.c.b16 %v1870, %v1868
        %v1989 = vpack.c.b16 %v1871, %v1869
        %v1990 = vpack.c.b16 %v1874, %v1872
        %v1991 = vpack.c.b16 %v1875, %v1873
        %v1992 = vpack.c.b16 %v1878, %v1876
        %v1993 = vpack.c.b16 %v1879, %v1877
        %v1994 = vpack.c.b16 %v1882, %v1880
        %v1995 = vpack.c.b16 %v1883, %v1881
        %v1996 = vpack.c.b16 %v1886, %v1884
        %v1997 = vpack.c.b16 %v1887, %v1885
        %v1998 = vpack.c.b16 %v1890, %v1888
        %v1999 = vpack.c.b16 %v1891, %v1889
        %v2000 = vpack.c.b16 %v1894, %v1892
        %v2001 = vpack.c.b16 %v1895, %v1893
        %v2002 = vpack.c.b16 %v1898, %v1896
        %v2003 = vpack.c.b16 %v1899, %v1897
        %v2004 = vpack.c.b16 %v1902, %v1900
        %v2005 = vpack.c.b16 %v1903, %v1901
        %v2006 = vpack.c.b16 %v1906, %v1904
        %v2007 = vpack.c.b16 %v1907, %v1905
        %v2008 = vpack.c.b16 %v1910, %v1908
        %v2009 = vpack.c.b16 %v1911, %v1909
        %v2010 = vpack.c.b16 %v1914, %v1912
        %v2011 = vpack.c.b16 %v1915, %v1913
        %v2012 = vpack.c.b16 %v1918, %v1916
        %v2013 = vpack.c.b16 %v1919, %v1917
        %v2014 = vpack.c.b16 %v1922, %v1920
        %v2015 = vpack.c.b16 %v1923, %v1921
        %v2016 = vpack.c.b16 %v1926, %v1924
        %v2017 = vpack.c.b16 %v1927, %v1925
        %v2018 = vpack.c.b16 %v1930, %v1928
        %v2019 = vpack.c.b16 %v1931, %v1929
        %v2020 = vpack.c.b16 %v1934, %v1932
        %v2021 = vpack.c.b16 %v1935, %v1933
        %v2022 = vpack.c.b16 %v1938, %v1936
        %v2023 = vpack.c.b16 %v1939, %v1937
        %v2024 = vpack.c.b16 %v1942, %v1940
        %v2025 = vpack.c.b16 %v1943, %v1941
        %v2026 = vpack.c.b16 %v1946, %v1944
        %v2027 = vpack.c.b16 %v1947, %v1945
        %v2028 = vpack.c.b16 %v1950, %v1948
        %v2029 = vpack.c.b16 %v1951, %v1949
        %v2030 = vpack.c.b16 %v1954, %v1952
        %v2031 = vpack.c.b16 %v1955, %v1953
        %v2032 = vpack.c.b16 %v1958, %v1956
        %v2033 = vpack.c.b16 %v1959, %v1957
        %v2034 = vpack.c.b16 %v1962, %v1960
        %v2035 = vpack.c.b16 %v1963, %v1961
        %v2036 = vpack.c.b16 %v1966, %v1964
        %v2037 = vpack.c.b16 %v1967, %v1965
        %v2038 = vpack.c.b16 %v1970, %v1968
        %v2039 = vpack.c.b16 %v1971, %v1969
        %v2040 = vpack.c.b16 %v1974, %v1972
        %v2041 = vpack.c.b16 %v1975, %v1973
        %v2042 = vpack.c.b16 %v1978, %v1976
        %v2043 = vpack.c.b16 %v1979, %v1977
        %2108 = vmatprep.subr.bf16.mxu0 %v1981
        %2109 = vmatpush1.bf16.msra.mxu0 %v1980
        %2110 = vmatprep.subr.bf16.mxu0 %v1983
        %2111 = vmatpush1.bf16.msra.mxu0 %v1982
        %2112 = vmatprep.subr.bf16.mxu0 %v1985
        %2113 = vmatpush1.bf16.msra.mxu0 %v1984
        %2114 = vmatprep.subr.bf16.mxu0 %v1987
        %2115 = vmatpush1.bf16.msra.mxu0 %v1986
        %2116 = vmatprep.subr.bf16.mxu0 %v1989
        %2117 = vmatpush1.bf16.msra.mxu0 %v1988
        %2118 = vmatprep.subr.bf16.mxu0 %v1991
        %2119 = vmatpush1.bf16.msra.mxu0 %v1990
        %2120 = vmatprep.subr.bf16.mxu0 %v1993
        %2121 = vmatpush1.bf16.msra.mxu0 %v1992
        %2122 = vmatprep.subr.bf16.mxu0 %v1995
        %2123 = vmatpush1.bf16.msra.mxu0 %v1994
        %2124 = vmatprep.subr.bf16.mxu0 %v1997
        %2125 = vmatpush1.bf16.msra.mxu0 %v1996
        %2126 = vmatprep.subr.bf16.mxu0 %v1999
        %2127 = vmatpush1.bf16.msra.mxu0 %v1998
        %2128 = vmatprep.subr.bf16.mxu0 %v2001
        %2129 = vmatpush1.bf16.msra.mxu0 %v2000
        %2130 = vmatprep.subr.bf16.mxu0 %v2003
        %2131 = vmatpush1.bf16.msra.mxu0 %v2002
        %2132 = vmatprep.subr.bf16.mxu0 %v2005
        %2133 = vmatpush1.bf16.msra.mxu0 %v2004
        %2134 = vmatprep.subr.bf16.mxu0 %v2007
        %2135 = vmatpush1.bf16.msra.mxu0 %v2006
        %2136 = vmatprep.subr.bf16.mxu0 %v2009
        %2137 = vmatpush1.bf16.msra.mxu0 %v2008
        %2138 = vmatprep.subr.bf16.mxu0 %v2011
        %2139 = vmatpush1.bf16.msra.mxu0 %v2010
        %2140 = vmatprep.mubr.bf16.mxu0 %v1681
        %2141 = vmatmul.mubr.bf16.gmra.mrb[0].mxu0 %v1680
        %v2142 = vpop.f32.mrb[0].mxu0
        %v2143 = vadd.f32 %v1781, %v2142
        %v2144 = vpop.f32.mrb[0].mxu0
        %v2145 = vadd.f32 %v1785, %v2144
        %v2146 = vpop.f32.mrb[0].mxu0
        %v2147 = vadd.f32 %v1781, %v2146
        %v2148 = vpop.f32.mrb[0].mxu0
        %v2149 = vadd.f32 %v1785, %v2148
        %2150 = vmatprep.mubr.bf16.mxu0 %v1685
        %2151 = vmatmul.mubr.bf16.gmra.mrb[0].mxu0 %v1684
        %v2152 = vpop.f32.mrb[0].mxu0
        %v2153 = vadd.f32 %v1781, %v2152
        %v2154 = vpop.f32.mrb[0].mxu0
        %v2155 = vadd.f32 %v1785, %v2154
        %v2156 = vpop.f32.mrb[0].mxu0
        %v2157 = vadd.f32 %v1781, %v2156
        %v2158 = vpop.f32.mrb[0].mxu0
        %v2159 = vadd.f32 %v1785, %v2158
        %2160 = vmatprep.mubr.bf16.mxu0 %v1689
        %2161 = vmatmul.mubr.bf16.gmra.mrb[0].mxu0 %v1688
        %v2162 = vpop.f32.mrb[0].mxu0
        %v2163 = vadd.f32 %v1781, %v2162
        %v2164 = vpop.f32.mrb[0].mxu0
        %v2165 = vadd.f32 %v1785, %v2164
        %v2166 = vpop.f32.mrb[0].mxu0
        %v2167 = vadd.f32 %v1781, %v2166
        %v2168 = vpop.f32.mrb[0].mxu0
        %v2169 = vadd.f32 %v1785, %v2168
        %2170 = vmatprep.mubr.bf16.mxu0 %v1693
        %2171 = vmatmul.mubr.bf16.gmra.mrb[0].mxu0 %v1692
        %v2172 = vpop.f32.mrb[0].mxu0
        %v2173 = vadd.f32 %v1781, %v2172
        %v2174 = vpop.f32.mrb[0].mxu0
        %v2175 = vadd.f32 %v1785, %v2174
        %v2176 = vpop.f32.mrb[0].mxu0
        %v2177 = vadd.f32 %v1781, %v2176
        %v2178 = vpop.f32.mrb[0].mxu0
        %v2179 = vadd.f32 %v1785, %v2178
        %2180 = vmatprep.mubr.bf16.mxu0 %v1697
        %2181 = vmatmul.mubr.bf16.gmra.mrb[0].mxu0 %v1696
        %v2182 = vpop.f32.mrb[0].mxu0
        %v2183 = vadd.f32 %v1781, %v2182
        %v2184 = vpop.f32.mrb[0].mxu0
        %v2185 = vadd.f32 %v1785, %v2184
        %v2186 = vpop.f32.mrb[0].mxu0
        %v2187 = vadd.f32 %v1781, %v2186
        %v2188 = vpop.f32.mrb[0].mxu0
        %v2189 = vadd.f32 %v1785, %v2188
        %2190 = vmatprep.mubr.bf16.mxu0 %v1701
        %2191 = vmatmul.mubr.bf16.gmra.mrb[0].mxu0 %v1700
        %v2192 = vpop.f32.mrb[0].mxu0
        %v2193 = vadd.f32 %v1781, %v2192
        %v2194 = vpop.f32.mrb[0].mxu0
        %v2195 = vadd.f32 %v1785, %v2194
        %v2196 = vpop.f32.mrb[0].mxu0
        %v2197 = vadd.f32 %v1781, %v2196
        %v2198 = vpop.f32.mrb[0].mxu0
        %v2199 = vadd.f32 %v1785, %v2198
        %2200 = vmatprep.mubr.bf16.mxu0 %v1705
        %2201 = vmatmul.mubr.bf16.gmra.mrb[0].mxu0 %v1704
        %v2202 = vpop.f32.mrb[0].mxu0
        %v2203 = vadd.f32 %v1781, %v2202
        %v2204 = vpop.f32.mrb[0].mxu0
        %v2205 = vadd.f32 %v1785, %v2204
        %v2206 = vpop.f32.mrb[0].mxu0
        %v2207 = vadd.f32 %v1781, %v2206
        %v2208 = vpop.f32.mrb[0].mxu0
        %v2209 = vadd.f32 %v1785, %v2208
        %2210 = vmatprep.mubr.bf16.mxu0 %v1709
        %2211 = vmatmul.mubr.bf16.gmra.mrb[0].mxu0 %v1708
        %v2212 = vpop.f32.mrb[0].mxu0
        %v2213 = vadd.f32 %v1781, %v2212
        %v2214 = vpop.f32.mrb[0].mxu0
        %v2215 = vadd.f32 %v1785, %v2214
        %v2216 = vpop.f32.mrb[0].mxu0
        %v2217 = vadd.f32 %v1781, %v2216
        %v2218 = vpop.f32.mrb[0].mxu0
        %v2219 = vadd.f32 %v1785, %v2218
        %2220 = vdwg.mxu0
        %2221 = vmatprep.subr.bf16.mxu0 %v2013
        %2222 = vmatpush1.bf16.msra.mxu0 %v2012
        %2223 = vmatprep.subr.bf16.mxu0 %v2015
        %2224 = vmatpush1.bf16.msra.mxu0 %v2014
        %2225 = vmatprep.subr.bf16.mxu0 %v2017
        %2226 = vmatpush1.bf16.msra.mxu0 %v2016
        %2227 = vmatprep.subr.bf16.mxu0 %v2019
        %2228 = vmatpush1.bf16.msra.mxu0 %v2018
        %2229 = vmatprep.subr.bf16.mxu0 %v2021
        %2230 = vmatpush1.bf16.msra.mxu0 %v2020
        %2231 = vmatprep.subr.bf16.mxu0 %v2023
        %2232 = vmatpush1.bf16.msra.mxu0 %v2022
        %2233 = vmatprep.subr.bf16.mxu0 %v2025
        %2234 = vmatpush1.bf16.msra.mxu0 %v2024
        %2235 = vmatprep.subr.bf16.mxu0 %v2027
        %2236 = vmatpush1.bf16.msra.mxu0 %v2026
        %2237 = vmatprep.subr.bf16.mxu0 %v2029
        %2238 = vmatpush1.bf16.msra.mxu0 %v2028
        %2239 = vmatprep.subr.bf16.mxu0 %v2031
        %2240 = vmatpush1.bf16.msra.mxu0 %v2030
        %2241 = vmatprep.subr.bf16.mxu0 %v2033
        %2242 = vmatpush1.bf16.msra.mxu0 %v2032
        %2243 = vmatprep.subr.bf16.mxu0 %v2035
        %2244 = vmatpush1.bf16.msra.mxu0 %v2034
        %2245 = vmatprep.subr.bf16.mxu0 %v2037
        %2246 = vmatpush1.bf16.msra.mxu0 %v2036
        %2247 = vmatprep.subr.bf16.mxu0 %v2039
        %2248 = vmatpush1.bf16.msra.mxu0 %v2038
        %2249 = vmatprep.subr.bf16.mxu0 %v2041
        %2250 = vmatpush1.bf16.msra.mxu0 %v2040
        %2251 = vmatprep.subr.bf16.mxu0 %v2043
        %2252 = vmatpush1.bf16.msra.mxu0 %v2042
        %2253 = vmatprep.mubr.bf16.mxu0 %v1683
        %2254 = vmatmul.mubr.bf16.gmra.mrb[0].mxu0 %v1682
        %v2255 = vpop.f32.mrb[0].mxu0
        %v2256 = vadd.f32 %v2143, %v2255
        %v2257 = vpop.f32.mrb[0].mxu0
        %v2258 = vadd.f32 %v2145, %v2257
        %v2259 = vpop.f32.mrb[0].mxu0
        %v2260 = vadd.f32 %v2147, %v2259
        %v2261 = vpop.f32.mrb[0].mxu0
        %v2262 = vadd.f32 %v2149, %v2261
        %2263 = vmatprep.mubr.bf16.mxu0 %v1687
        %2264 = vmatmul.mubr.bf16.gmra.mrb[0].mxu0 %v1686
        %v2265 = vpop.f32.mrb[0].mxu0
        %v2266 = vadd.f32 %v2153, %v2265
        %v2267 = vpop.f32.mrb[0].mxu0
        %v2268 = vadd.f32 %v2155, %v2267
        %v2269 = vpop.f32.mrb[0].mxu0
        %v2270 = vadd.f32 %v2157, %v2269
        %v2271 = vpop.f32.mrb[0].mxu0
        %v2272 = vadd.f32 %v2159, %v2271
        %2273 = vmatprep.mubr.bf16.mxu0 %v1691
        %2274 = vmatmul.mubr.bf16.gmra.mrb[0].mxu0 %v1690
        %v2275 = vpop.f32.mrb[0].mxu0
        %v2276 = vadd.f32 %v2163, %v2275
        %v2277 = vpop.f32.mrb[0].mxu0
        %v2278 = vadd.f32 %v2165, %v2277
        %v2279 = vpop.f32.mrb[0].mxu0
        %v2280 = vadd.f32 %v2167, %v2279
        %v2281 = vpop.f32.mrb[0].mxu0
        %v2282 = vadd.f32 %v2169, %v2281
        %2283 = vmatprep.mubr.bf16.mxu0 %v1695
        %2284 = vmatmul.mubr.bf16.gmra.mrb[0].mxu0 %v1694
        %v2285 = vpop.f32.mrb[0].mxu0
        %v2286 = vadd.f32 %v2173, %v2285
        %v2287 = vpop.f32.mrb[0].mxu0
        %v2288 = vadd.f32 %v2175, %v2287
        %v2289 = vpop.f32.mrb[0].mxu0
        %v2290 = vadd.f32 %v2177, %v2289
        %v2291 = vpop.f32.mrb[0].mxu0
        %v2292 = vadd.f32 %v2179, %v2291
        %2293 = vmatprep.mubr.bf16.mxu0 %v1699
        %2294 = vmatmul.mubr.bf16.gmra.mrb[0].mxu0 %v1698
        %v2295 = vpop.f32.mrb[0].mxu0
        %v2296 = vadd.f32 %v2183, %v2295
        %v2297 = vpop.f32.mrb[0].mxu0
        %v2298 = vadd.f32 %v2185, %v2297
        %v2299 = vpop.f32.mrb[0].mxu0
        %v2300 = vadd.f32 %v2187, %v2299
        %v2301 = vpop.f32.mrb[0].mxu0
        %v2302 = vadd.f32 %v2189, %v2301
        %2303 = vmatprep.mubr.bf16.mxu0 %v1703
        %2304 = vmatmul.mubr.bf16.gmra.mrb[0].mxu0 %v1702
        %v2305 = vpop.f32.mrb[0].mxu0
        %v2306 = vadd.f32 %v2193, %v2305
        %v2307 = vpop.f32.mrb[0].mxu0
        %v2308 = vadd.f32 %v2195, %v2307
        %v2309 = vpop.f32.mrb[0].mxu0
        %v2310 = vadd.f32 %v2197, %v2309
        %v2311 = vpop.f32.mrb[0].mxu0
        %v2312 = vadd.f32 %v2199, %v2311
        %2313 = vmatprep.mubr.bf16.mxu0 %v1707
        %2314 = vmatmul.mubr.bf16.gmra.mrb[0].mxu0 %v1706
        %v2315 = vpop.f32.mrb[0].mxu0
        %v2316 = vadd.f32 %v2203, %v2315
        %v2317 = vpop.f32.mrb[0].mxu0
        %v2318 = vadd.f32 %v2205, %v2317
        %v2319 = vpop.f32.mrb[0].mxu0
        %v2320 = vadd.f32 %v2207, %v2319
        %v2321 = vpop.f32.mrb[0].mxu0
        %v2322 = vadd.f32 %v2209, %v2321
        %2323 = vmatprep.mubr.bf16.mxu0 %v1711
        %2324 = vmatmul.mubr.bf16.gmra.mrb[0].mxu0 %v1710
        %v2325 = vpop.f32.mrb[0].mxu0
        %v2326 = vadd.f32 %v2213, %v2325
        %v2327 = vpop.f32.mrb[0].mxu0
        %v2328 = vadd.f32 %v2215, %v2327
        %v2329 = vpop.f32.mrb[0].mxu0
        %v2330 = vadd.f32 %v2217, %v2329
        %v2331 = vpop.f32.mrb[0].mxu0
        %v2332 = vadd.f32 %v2219, %v2331
        %2333 = vdwg.mxu0
        %v2334 = vmax.f32 %v2256, 0.0
        %v2335 = vmax.f32 %v2258, 0.0
        %v2336 = vmax.f32 %v2260, 0.0
        %v2337 = vmax.f32 %v2262, 0.0
        %v2338 = vmax.f32 %v2266, 0.0
        %v2339 = vmax.f32 %v2268, 0.0
        %v2340 = vmax.f32 %v2270, 0.0
        %v2341 = vmax.f32 %v2272, 0.0
        %v2342 = vmax.f32 %v2276, 0.0
        %v2343 = vmax.f32 %v2278, 0.0
        %v2344 = vmax.f32 %v2280, 0.0
        %v2345 = vmax.f32 %v2282, 0.0
        %v2346 = vmax.f32 %v2286, 0.0
        %v2347 = vmax.f32 %v2288, 0.0
        %v2348 = vmax.f32 %v2290, 0.0
        %v2349 = vmax.f32 %v2292, 0.0
        %v2350 = vmax.f32 %v2296, 0.0
        %v2351 = vmax.f32 %v2298, 0.0
        %v2352 = vmax.f32 %v2300, 0.0
        %v2353 = vmax.f32 %v2302, 0.0
        %v2354 = vmax.f32 %v2306, 0.0
        %v2355 = vmax.f32 %v2308, 0.0
        %v2356 = vmax.f32 %v2310, 0.0
        %v2357 = vmax.f32 %v2312, 0.0
        %v2358 = vmax.f32 %v2316, 0.0
        %v2359 = vmax.f32 %v2318, 0.0
        %v2360 = vmax.f32 %v2320, 0.0
        %v2361 = vmax.f32 %v2322, 0.0
        %v2362 = vmax.f32 %v2326, 0.0
        %v2363 = vmax.f32 %v2328, 0.0
        %v2364 = vmax.f32 %v2330, 0.0
        %v2365 = vmax.f32 %v2332, 0.0
        %v2366 = vpack.c.bf16 %v2336, %v2334
        %v2367 = vpack.c.bf16 %v2337, %v2335
        %v2368 = vpack.c.bf16 %v2340, %v2338
        %v2369 = vpack.c.bf16 %v2341, %v2339
        %v2370 = vpack.c.bf16 %v2344, %v2342
        %v2371 = vpack.c.bf16 %v2345, %v2343
        %v2372 = vpack.c.bf16 %v2348, %v2346
        %v2373 = vpack.c.bf16 %v2349, %v2347
        %v2374 = vpack.c.bf16 %v2352, %v2350
        %v2375 = vpack.c.bf16 %v2353, %v2351
        %v2376 = vpack.c.bf16 %v2356, %v2354
        %v2377 = vpack.c.bf16 %v2357, %v2355
        %v2378 = vpack.c.bf16 %v2360, %v2358
        %v2379 = vpack.c.bf16 %v2361, %v2359
        %v2380 = vpack.c.bf16 %v2364, %v2362
        %v2381 = vpack.c.bf16 %v2365, %v2363
        %v2382 = vld [vmem:[#allocation8] sm:$0xf]
        %v2383 = vld [vmem:[#allocation8 + $0x4] sm:$0xf]
        %v2384 = vld [vmem:[#allocation8 + $0x8] sm:$0xf]
        %v2385 = vld [vmem:[#allocation8 + $0xc] sm:$0xf]
        %v2386 = vld [vmem:[#allocation8 + $0x10] sm:$0xf]
        %v2387 = vld [vmem:[#allocation8 + $0x14] sm:$0xf]
        %v2388 = vld [vmem:[#allocation8 + $0x18] sm:$0xf]
        %v2389 = vld [vmem:[#allocation8 + $0x1c] sm:$0xf]
        %v2390 = vld [vmem:[#allocation8 + $0x20] sm:$0xf]
        %v2391 = vld [vmem:[#allocation8 + $0x24] sm:$0xf]
        %v2392 = vld [vmem:[#allocation8 + $0x28] sm:$0xf]
        %v2393 = vld [vmem:[#allocation8 + $0x2c] sm:$0xf]
        %v2394 = vld [vmem:[#allocation8 + $0x30] sm:$0xf]
        %v2395 = vld [vmem:[#allocation8 + $0x34] sm:$0xf]
        %v2396 = vld [vmem:[#allocation8 + $0x38] sm:$0xf]
        %v2397 = vld [vmem:[#allocation8 + $0x3c] sm:$0xf]
        %v2398 = vld [vmem:[#allocation8 + $0x40] sm:$0xf]
        %v2399 = vld [vmem:[#allocation8 + $0x44] sm:$0xf]
        %v2400 = vld [vmem:[#allocation8 + $0x48] sm:$0xf]
        %v2401 = vld [vmem:[#allocation8 + $0x4c] sm:$0xf]
        %v2402 = vld [vmem:[#allocation8 + $0x50] sm:$0xf]
        %v2403 = vld [vmem:[#allocation8 + $0x54] sm:$0xf]
        %v2404 = vld [vmem:[#allocation8 + $0x58] sm:$0xf]
        %v2405 = vld [vmem:[#allocation8 + $0x5c] sm:$0xf]
        %v2406 = vld [vmem:[#allocation8 + $0x60] sm:$0xf]
        %v2407 = vld [vmem:[#allocation8 + $0x64] sm:$0xf]
        %v2408 = vld [vmem:[#allocation8 + $0x68] sm:$0xf]
        %v2409 = vld [vmem:[#allocation8 + $0x6c] sm:$0xf]
        %v2410 = vld [vmem:[#allocation8 + $0x70] sm:$0xf]
        %v2411 = vld [vmem:[#allocation8 + $0x74] sm:$0xf]
        %v2412 = vld [vmem:[#allocation8 + $0x78] sm:$0xf]
        %v2413 = vld [vmem:[#allocation8 + $0x7c] sm:$0xf]
        %v2414 = vld [vmem:[%s8] sm:$0x1]
        %v2416 = vlaneseq
        %v2417 = vshrl.u32 %v2416, 7
        %v2418 = vsub.s32 0, %v2417
        %v2419 = vrot.slane %v2414, %v2418
        %v2453 = vunpack.c.l.b16 %v2382
        %v2454 = vunpack.c.l.b16 %v2383
        %v2455 = vunpack.c.l.b16 %v2384
        %v2456 = vunpack.c.l.b16 %v2385
        %v2457 = vunpack.c.l.b16 %v2386
        %v2458 = vunpack.c.l.b16 %v2387
        %v2459 = vunpack.c.l.b16 %v2388
        %v2460 = vunpack.c.l.b16 %v2389
        %v2461 = vunpack.c.l.b16 %v2390
        %v2462 = vunpack.c.l.b16 %v2391
        %v2463 = vunpack.c.l.b16 %v2392
        %v2464 = vunpack.c.l.b16 %v2393
        %v2465 = vunpack.c.l.b16 %v2394
        %v2466 = vunpack.c.l.b16 %v2395
        %v2467 = vunpack.c.l.b16 %v2396
        %v2468 = vunpack.c.l.b16 %v2397
        %v2469 = vunpack.c.l.b16 %v2398
        %v2470 = vunpack.c.l.b16 %v2399
        %v2471 = vunpack.c.l.b16 %v2400
        %v2472 = vunpack.c.l.b16 %v2401
        %v2473 = vunpack.c.l.b16 %v2402
        %v2474 = vunpack.c.l.b16 %v2403
        %v2475 = vunpack.c.l.b16 %v2404
        %v2476 = vunpack.c.l.b16 %v2405
        %v2477 = vunpack.c.l.b16 %v2406
        %v2478 = vunpack.c.l.b16 %v2407
        %v2479 = vunpack.c.l.b16 %v2408
        %v2480 = vunpack.c.l.b16 %v2409
        %v2481 = vunpack.c.l.b16 %v2410
        %v2482 = vunpack.c.l.b16 %v2411
        %v2483 = vunpack.c.l.b16 %v2412
        %v2484 = vunpack.c.l.b16 %v2413
        %v2485 = vpack.c.b16 %v2454, %v2453
        %v2486 = vpack.c.b16 %v2456, %v2455
        %v2487 = vpack.c.b16 %v2458, %v2457
        %v2488 = vpack.c.b16 %v2460, %v2459
        %v2489 = vpack.c.b16 %v2462, %v2461
        %v2490 = vpack.c.b16 %v2464, %v2463
        %v2491 = vpack.c.b16 %v2466, %v2465
        %v2492 = vpack.c.b16 %v2468, %v2467
        %v2493 = vpack.c.b16 %v2470, %v2469
        %v2494 = vpack.c.b16 %v2472, %v2471
        %v2495 = vpack.c.b16 %v2474, %v2473
        %v2496 = vpack.c.b16 %v2476, %v2475
        %v2497 = vpack.c.b16 %v2478, %v2477
        %v2498 = vpack.c.b16 %v2480, %v2479
        %v2499 = vpack.c.b16 %v2482, %v2481
        %v2500 = vpack.c.b16 %v2484, %v2483
        %2517 = vmatprep.subr.bf16.mxu0 0
        %2518 = vmatpush1.bf16.msra.mxu0 %v2485
        %2519 = vmatprep.subr.bf16.mxu0 0
        %2520 = vmatpush1.bf16.msra.mxu0 %v2486
        %2521 = vmatprep.subr.bf16.mxu0 0
        %2522 = vmatpush1.bf16.msra.mxu0 %v2487
        %2523 = vmatprep.subr.bf16.mxu0 0
        %2524 = vmatpush1.bf16.msra.mxu0 %v2488
        %2525 = vmatprep.subr.bf16.mxu0 0
        %2526 = vmatpush1.bf16.msra.mxu0 %v2489
        %2527 = vmatprep.subr.bf16.mxu0 0
        %2528 = vmatpush1.bf16.msra.mxu0 %v2490
        %2529 = vmatprep.subr.bf16.mxu0 0
        %2530 = vmatpush1.bf16.msra.mxu0 %v2491
        %2531 = vmatprep.subr.bf16.mxu0 0
        %2532 = vmatpush1.bf16.msra.mxu0 %v2492
        %2533 = vmatprep.subr.bf16.mxu0 0
        %2534 = vmatpush1.bf16.msra.mxu0 %v2493
        %2535 = vmatprep.subr.bf16.mxu0 0
        %2536 = vmatpush1.bf16.msra.mxu0 %v2494
        %2537 = vmatprep.subr.bf16.mxu0 0
        %2538 = vmatpush1.bf16.msra.mxu0 %v2495
        %2539 = vmatprep.subr.bf16.mxu0 0
        %2540 = vmatpush1.bf16.msra.mxu0 %v2496
        %2541 = vmatprep.subr.bf16.mxu0 0
        %2542 = vmatpush1.bf16.msra.mxu0 %v2497
        %2543 = vmatprep.subr.bf16.mxu0 0
        %2544 = vmatpush1.bf16.msra.mxu0 %v2498
        %2545 = vmatprep.subr.bf16.mxu0 0
        %2546 = vmatpush1.bf16.msra.mxu0 %v2499
        %2547 = vmatprep.subr.bf16.mxu0 0
        %2548 = vmatpush1.bf16.msra.mxu0 %v2500
        %2549 = vmatprep.mubr.bf16.mxu0 %v2367
        %2550 = vmatmul.mubr.bf16.gmra.mrb[0].mxu0 %v2366
        %v2551 = vpop.f32.mrb[0].mxu0
        %v2552 = vadd.f32 %v2419, %v2551
        %v2553 = vpop.f32.mrb[0].mxu0
        %v2554 = vpop.f32.mrb[0].mxu0
        %v2555 = vadd.f32 %v2419, %v2554
        %v2556 = vpop.f32.mrb[0].mxu0
        %2557 = vmatprep.mubr.bf16.mxu0 %v2369
        %2558 = vmatmul.mubr.bf16.gmra.mrb[0].mxu0 %v2368
        %v2559 = vpop.f32.mrb[0].mxu0
        %v2560 = vadd.f32 %v2419, %v2559
        %v2561 = vpop.f32.mrb[0].mxu0
        %v2562 = vpop.f32.mrb[0].mxu0
        %v2563 = vadd.f32 %v2419, %v2562
        %v2564 = vpop.f32.mrb[0].mxu0
        %2565 = vmatprep.mubr.bf16.mxu0 %v2371
        %2566 = vmatmul.mubr.bf16.gmra.mrb[0].mxu0 %v2370
        %v2567 = vpop.f32.mrb[0].mxu0
        %v2568 = vadd.f32 %v2419, %v2567
        %v2569 = vpop.f32.mrb[0].mxu0
        %v2570 = vpop.f32.mrb[0].mxu0
        %v2571 = vadd.f32 %v2419, %v2570
        %v2572 = vpop.f32.mrb[0].mxu0
        %2573 = vmatprep.mubr.bf16.mxu0 %v2373
        %2574 = vmatmul.mubr.bf16.gmra.mrb[0].mxu0 %v2372
        %v2575 = vpop.f32.mrb[0].mxu0
        %v2576 = vadd.f32 %v2419, %v2575
        %v2577 = vpop.f32.mrb[0].mxu0
        %v2578 = vpop.f32.mrb[0].mxu0
        %v2579 = vadd.f32 %v2419, %v2578
        %v2580 = vpop.f32.mrb[0].mxu0
        %2581 = vmatprep.mubr.bf16.mxu0 %v2375
        %2582 = vmatmul.mubr.bf16.gmra.mrb[0].mxu0 %v2374
        %v2583 = vpop.f32.mrb[0].mxu0
        %v2584 = vadd.f32 %v2419, %v2583
        %v2585 = vpop.f32.mrb[0].mxu0
        %v2586 = vpop.f32.mrb[0].mxu0
        %v2587 = vadd.f32 %v2419, %v2586
        %v2588 = vpop.f32.mrb[0].mxu0
        %2589 = vmatprep.mubr.bf16.mxu0 %v2377
        %2590 = vmatmul.mubr.bf16.gmra.mrb[0].mxu0 %v2376
        %v2591 = vpop.f32.mrb[0].mxu0
        %v2592 = vadd.f32 %v2419, %v2591
        %v2593 = vpop.f32.mrb[0].mxu0
        %v2594 = vpop.f32.mrb[0].mxu0
        %v2595 = vadd.f32 %v2419, %v2594
        %v2596 = vpop.f32.mrb[0].mxu0
        %2597 = vmatprep.mubr.bf16.mxu0 %v2379
        %2598 = vmatmul.mubr.bf16.gmra.mrb[0].mxu0 %v2378
        %v2599 = vpop.f32.mrb[0].mxu0
        %v2600 = vadd.f32 %v2419, %v2599
        %v2601 = vpop.f32.mrb[0].mxu0
        %v2602 = vpop.f32.mrb[0].mxu0
        %v2603 = vadd.f32 %v2419, %v2602
        %v2604 = vpop.f32.mrb[0].mxu0
        %2605 = vmatprep.mubr.bf16.mxu0 %v2381
        %2606 = vmatmul.mubr.bf16.gmra.mrb[0].mxu0 %v2380
        %v2607 = vpop.f32.mrb[0].mxu0
        %v2608 = vadd.f32 %v2419, %v2607
        %v2609 = vpop.f32.mrb[0].mxu0
        %v2610 = vpop.f32.mrb[0].mxu0
        %v2611 = vadd.f32 %v2419, %v2610
        %v2612 = vpop.f32.mrb[0].mxu0
        %2613 = vdwg.mxu0
        %2614 = vst [vmem:[%s411] sm:$0xff] %v2552
        %2615 = vst [vmem:[%s411 + $0x8] sm:$0xff] %v2555
        %2616 = vst [vmem:[%s411 + $0x10] sm:$0xff] %v2560
        %2617 = vst [vmem:[%s411 + $0x18] sm:$0xff] %v2563
        %2618 = vst [vmem:[%s411 + $0x20] sm:$0xff] %v2568
        %2619 = vst [vmem:[%s411 + $0x28] sm:$0xff] %v2571
        %2620 = vst [vmem:[%s411 + $0x30] sm:$0xff] %v2576
        %2621 = vst [vmem:[%s411 + $0x38] sm:$0xff] %v2579
        %2622 = vst [vmem:[%s411 + $0x40] sm:$0xff] %v2584
        %2623 = vst [vmem:[%s411 + $0x48] sm:$0xff] %v2587
        %2624 = vst [vmem:[%s411 + $0x50] sm:$0xff] %v2592
        %2625 = vst [vmem:[%s411 + $0x58] sm:$0xff] %v2595
        %2626 = vst [vmem:[%s411 + $0x60] sm:$0xff] %v2600
        %2627 = vst [vmem:[%s411 + $0x68] sm:$0xff] %v2603
        %2628 = vst [vmem:[%s411 + $0x70] sm:$0xff] %v2608
        %2629 = vst [vmem:[%s411 + $0x78] sm:$0xff] %v2611
        %s2630 = sand.u32 %s235, 1
        %s2631 = scalar_lea.sflag [#allocation4], %s2630
        %s2632 = sand.u32 %s235, 1
        %s2633 = smul.addr %s2632, 128
        %s2634 = scalar_lea.vmem [#allocation10], %s2633
        // Predicated region
        $region73: #{tpu_custom_call.1} parent=55 // pred_check
          %p2635 = pneg %p245
        $region74: #{tpu_custom_call.1} parent=55 // pred_check_branch
          %2637 = sbr.rel (%p2635) target = $region76
        $region75: #{tpu_custom_call.1} parent=55 // pred_region
          %s2638 = smul.u32 16, %s28
          %s2640 = ssub.s32 2048, 2048
          %2641 = vsyncadd %s2631, %s2640
          %s2642 = smul.addr %s2638, 128
          %s2643 = scalar_lea.hbm %s9, %s2642
          %s2644 = sshll.u32 %s2634, 4
          %s2645 = int_to_ptr.vmem [resolvable:$true] %s2644
          %2650 = dma.vmem_to_hbm [thread:$0]  %s2645, 2048, %s2643, %s2631, 128, 128, 8
        $region76: #{tpu_custom_call.1} parent=55 // pred_fallthru
          _
      $region56: #{tpu_custom_call.1} parent=5 // pred_fallthru
        _
      %p2651 = scmp.le.s32.totalorder 2, %s23
      // Predicated region
      $region77: #{tpu_custom_call.1} parent=5 // pred_check
        %p2652 = pneg %p2651
      $region78: #{tpu_custom_call.1} parent=5 // pred_check_branch
        %2654 = sbr.rel (%p2652) target = $region80
      $region79: #{tpu_custom_call.1} parent=5 // pred_region
        %s2655 = ssub.s32 %s23, 2
        // Predicated region
        $region81: #{tpu_custom_call.1} parent=79 // pred_check
          %p2656 = pneg %p251
        $region82: #{tpu_custom_call.1} parent=79 // pred_check_branch
          %2658 = sbr.rel (%p2656) target = $region84
        $region83: #{tpu_custom_call.1} parent=79 // pred_region
          %s2659 = sand.u32 %s236, 1
          %s2660 = scalar_lea.sflag [#allocation4], %s2659
          %s2661 = sand.u32 %s236, 1
          %s2662 = smul.addr %s2661, 128
          %s2663 = scalar_lea.vmem [#allocation10], %s2662
          %2664 = dma.done %s2660, 2048
        $region84: #{tpu_custom_call.1} parent=79 // pred_fallthru
          _
      $region80: #{tpu_custom_call.1} parent=5 // pred_fallthru
        _
    $region6: #{tpu_custom_call.1} parent=1 // loop_footer
      %s27 = sadd.s32 1, %s23
    $region7: #{tpu_custom_call.1} parent=1 // loop_footer_branch
      %22 = sbr.rel target = $region3
    $region8: #{tpu_custom_call.1} parent=1 // loop_exit
      _
    %2665 = vsyncpa [#allocation3], 1
    %s2666 = scalar_lea.sflag [#allocation3], 1
    %2667 = vsyncpa %s2666, 1
    %2668 = vsyncpa [#allocation6], 1
    %2669 = vsyncpa [#allocation9], 1
    %2670 = vsyncpa [#allocation4], 1
    %s2671 = scalar_lea.sflag [#allocation4], 1
    %2672 = vsyncpa %s2671, 1

</llo_original>
